<compile_context>
chip_gen: v5e
topology: v5e:2x2
jax: 0.10.0
libtpu: 0.0.40
codegen_flags: <defaults>
</compile_context>

<pallas_src>
import jax
import jax.numpy as jnp
from jax.experimental import pallas as pl
from jax.experimental.pallas import tpu as pltpu

NEG_SLOPE = 0.01  # torch.nn.functional.leaky_relu default negative_slope
LANE = 128


def _leaky_relu(x):
    return jnp.where(x > 0, x, NEG_SLOPE * x)


def dqn_kernel(x_ref,
               w1_ref, b1_ref, w2_ref, b2_ref,
               w3_ref, b3_ref, w4_ref, b4_ref,
               q_ref):
    x = x_ref[...]
    # layer1: Linear(in, 64) + LeakyReLU
    h = _leaky_relu(
        jnp.dot(x, w1_ref[...], preferred_element_type=jnp.float32) + b1_ref[...])
    # layer2: Linear(64, 150) + LeakyReLU
    h = _leaky_relu(
        jnp.dot(h, w2_ref[...], preferred_element_type=jnp.float32) + b2_ref[...])
    # layer3: Linear(150, 100) + LeakyReLU
    h = _leaky_relu(
        jnp.dot(h, w3_ref[...], preferred_element_type=jnp.float32) + b3_ref[...])
    # layer4: Linear(100, out_pad) — no activation; padded lanes stay zero.
    q = jnp.dot(h, w4_ref[...], preferred_element_type=jnp.float32) + b4_ref[...]
    q_ref[...] = q.astype(q_ref.dtype)


def _pick_batch_tile(B):
    """Largest MXU-friendly tile (multiple of 8) that still yields >= 2 grid
    steps (so v7x megacore has work to shard); fall back to the full batch."""
    for cand in (1024, 512, 256, 128, 64, 32, 16, 8):
        if B % cand == 0 and B // cand >= 2:
            return cand
    return B


def dqn_forward(x, params, *, batch_tile=None):
    """Forward pass of DQNModel.  x: (B, input_dim) f32 -> (B, output_dim) f32."""
    B, in_dim = x.shape
    out_dim = params["w4"].shape[1]
    out_pad = max(LANE, ((out_dim + LANE - 1) // LANE) * LANE)

    tb = _pick_batch_tile(B) if batch_tile is None else batch_tile
    assert B % tb == 0, "batch must be divisible by batch_tile"

    # Lane-dense output slab: pad final weight/bias with zero columns.
    w4p = jnp.pad(params["w4"], ((0, 0), (0, out_pad - out_dim)))
    b4p = jnp.pad(params["b4"], ((0, 0), (0, out_pad - out_dim)))

    weights = [params["w1"], params["b1"], params["w2"], params["b2"],
               params["w3"], params["b3"], w4p, b4p]

    flops = 2 * B * (in_dim * 64 + 64 * 150 + 150 * 100 + 100 * out_pad)
    bytes_accessed = (x.size + sum(int(w.size) for w in weights)
                      + B * out_pad) * 4
    cost = pl.CostEstimate(flops=int(flops), transcendentals=0,
                           bytes_accessed=int(bytes_accessed))

    def run(single_buffer_weights):
        def weight_spec(arr):
            index_map = (lambda i, _nd=arr.ndim: (0,) * _nd)  # grid-invariant
            if single_buffer_weights:
                # Constant-index blocks don't need double buffering.
                return pl.BlockSpec(arr.shape, index_map,
                                    pipeline_mode=pl.Buffered(1))
            return pl.BlockSpec(arr.shape, index_map)

        grid_spec = pltpu.PrefetchScalarGridSpec(
            num_scalar_prefetch=0,
            grid=(B // tb,),
            in_specs=[pl.BlockSpec((tb, in_dim), lambda i: (i, 0))]
                     + [weight_spec(w) for w in weights],
            out_specs=pl.BlockSpec((tb, out_pad), lambda i: (i, 0)),
        )
        return pl.pallas_call(
            dqn_kernel,
            out_shape=jax.ShapeDtypeStruct((B, out_pad), jnp.float32),
            grid_spec=grid_spec,
            compiler_params=pltpu.CompilerParams(
                dimension_semantics=("parallel",)),
            cost_estimate=cost,
        )(x, *weights)

    try:
        q_padded = run(True)
    except Exception:
        # Fallback if this jax build rejects single-buffered weight BlockSpecs.
        q_padded = run(False)

    return q_padded[:, :out_dim]


def init_params(key, input_dim, output_dim):
    """Deterministic init mimicking torch.nn.Linear default U(-1/sqrt(fan_in), +)."""
    dims = [
        ("w1", (input_dim, 64), input_dim), ("b1", (1, 64), input_dim),
        ("w2", (64, 150), 64),              ("b2", (1, 150), 64),
        ("w3", (150, 100), 150),            ("b3", (1, 100), 150),
        ("w4", (100, output_dim), 100),     ("b4", (1, output_dim), 100),
    ]
    params = {}
    keys = jax.random.split(key, len(dims))
    for (name, shape, fan_in), k in zip(dims, keys):
        bound = 1.0 / (fan_in ** 0.5)
        params[name] = jax.random.uniform(
            k, shape, dtype=jnp.float32, minval=-bound, maxval=bound)
    return params


def dqn_reference(x, p):
    """Pure-JAX reference for correctness checking."""
    h = _leaky_relu(x @ p["w1"] + p["b1"])
    h = _leaky_relu(h @ p["w2"] + p["b2"])
    h = _leaky_relu(h @ p["w3"] + p["b3"])
    return h @ p["w4"] + p["b4"]


if __name__ == "__main__":
    input_dim, output_dim, batch = 32, 8, 64

    key = jax.random.PRNGKey(0)
    key_x, key_p = jax.random.split(key)
    x = jax.random.normal(key_x, (batch, input_dim), dtype=jnp.float32)
    params = init_params(key_p, input_dim, output_dim)

    q = dqn_forward(x, params)
    q = jax.block_until_ready(q)

    q_ref = dqn_reference(x, params)
    assert q.shape == (batch, output_dim)
    assert jnp.allclose(q, q_ref, atol=1e-5, rtol=1e-5), "mismatch vs reference"

    print("KERNEL_OK")
</pallas_src>

<mosaic_0001>
module attributes {stable_mosaic.version = 11 : i64} {
  func.func @dqn_kernel(%arg0: i32, %arg1: memref<32x32xf32, #tpu.memory_space<vmem>>, %arg2: memref<32x64xf32, #tpu.memory_space<vmem>>, %arg3: memref<1x64xf32, #tpu.memory_space<vmem>>, %arg4: memref<64x150xf32, #tpu.memory_space<vmem>>, %arg5: memref<1x150xf32, #tpu.memory_space<vmem>>, %arg6: memref<150x100xf32, #tpu.memory_space<vmem>>, %arg7: memref<1x100xf32, #tpu.memory_space<vmem>>, %arg8: memref<100x128xf32, #tpu.memory_space<vmem>>, %arg9: memref<1x128xf32, #tpu.memory_space<vmem>>, %arg10: memref<32x128xf32, #tpu.memory_space<vmem>>) attributes {dimension_semantics = [#tpu.dimension_semantics<parallel>], iteration_bounds = array<i64: 2>, scalar_prefetch = 0 : i64, scratch_operands = 0 : i64, tpu.core_type = #tpu.core_type<tc>, window_params = [{transform_indices = @transform_0, window_bounds = array<i64: 32, 32>}, {pipeline_mode = #tpu.pipeline_mode<synchronous>, transform_indices = @transform_1, window_bounds = array<i64: 32, 64>}, {pipeline_mode = #tpu.pipeline_mode<synchronous>, transform_indices = @transform_2, window_bounds = array<i64: 1, 64>}, {pipeline_mode = #tpu.pipeline_mode<synchronous>, transform_indices = @transform_3, window_bounds = array<i64: 64, 150>}, {pipeline_mode = #tpu.pipeline_mode<synchronous>, transform_indices = @transform_4, window_bounds = array<i64: 1, 150>}, {pipeline_mode = #tpu.pipeline_mode<synchronous>, transform_indices = @transform_5, window_bounds = array<i64: 150, 100>}, {pipeline_mode = #tpu.pipeline_mode<synchronous>, transform_indices = @transform_6, window_bounds = array<i64: 1, 100>}, {pipeline_mode = #tpu.pipeline_mode<synchronous>, transform_indices = @transform_7, window_bounds = array<i64: 100, 128>}, {pipeline_mode = #tpu.pipeline_mode<synchronous>, transform_indices = @transform_8, window_bounds = array<i64: 1, 128>}, {transform_indices = @transform_9, window_bounds = array<i64: 32, 128>}]} {
    %c0 = arith.constant 0 : index
    %c0_0 = arith.constant 0 : index
    %0 = vector.load %arg1[%c0, %c0_0] : memref<32x32xf32, #tpu.memory_space<vmem>>, vector<32x32xf32>
    %c0_1 = arith.constant 0 : index
    %c0_2 = arith.constant 0 : index
    %1 = vector.load %arg2[%c0_1, %c0_2] : memref<32x64xf32, #tpu.memory_space<vmem>>, vector<32x64xf32>
    %cst = arith.constant dense<0.000000e+00> : vector<32x64xf32>
    %2 = tpu.matmul %0, %1, %cst {dimension_numbers = #tpu.dot_dimension_numbers<[1], [0], [0], [1], [0, 0, 1, 1], [], []>} : vector<32x32xf32>, vector<32x64xf32>, vector<32x64xf32> -> vector<32x64xf32>
    %c0_3 = arith.constant 0 : index
    %c0_4 = arith.constant 0 : index
    %3 = vector.load %arg3[%c0_3, %c0_4] : memref<1x64xf32, #tpu.memory_space<vmem>>, vector<1x64xf32>
    %4 = vector.broadcast %3 : vector<1x64xf32> to vector<32x64xf32>
    %5 = arith.addf %2, %4 : vector<32x64xf32>
    %cst_5 = arith.constant 0.000000e+00 : f32
    %6 = vector.broadcast %cst_5 : f32 to vector<32x64xf32>
    %7 = arith.cmpf ogt, %5, %6 : vector<32x64xf32>
    %cst_6 = arith.constant 0.00999999977 : f32
    %8 = vector.broadcast %cst_6 : f32 to vector<32x64xf32>
    %9 = arith.mulf %8, %5 : vector<32x64xf32>
    %10 = arith.select %7, %5, %9 : vector<32x64xi1>, vector<32x64xf32>
    %c0_7 = arith.constant 0 : index
    %c0_8 = arith.constant 0 : index
    %11 = vector.load %arg4[%c0_7, %c0_8] : memref<64x150xf32, #tpu.memory_space<vmem>>, vector<64x150xf32>
    %cst_9 = arith.constant dense<0.000000e+00> : vector<32x150xf32>
    %12 = tpu.matmul %10, %11, %cst_9 {dimension_numbers = #tpu.dot_dimension_numbers<[1], [0], [0], [1], [0, 0, 1, 1], [], []>} : vector<32x64xf32>, vector<64x150xf32>, vector<32x150xf32> -> vector<32x150xf32>
    %c0_10 = arith.constant 0 : index
    %c0_11 = arith.constant 0 : index
    %13 = vector.load %arg5[%c0_10, %c0_11] : memref<1x150xf32, #tpu.memory_space<vmem>>, vector<1x150xf32>
    %14 = vector.broadcast %13 : vector<1x150xf32> to vector<32x150xf32>
    %15 = arith.addf %12, %14 : vector<32x150xf32>
    %cst_12 = arith.constant 0.000000e+00 : f32
    %16 = vector.broadcast %cst_12 : f32 to vector<32x150xf32>
    %17 = arith.cmpf ogt, %15, %16 : vector<32x150xf32>
    %cst_13 = arith.constant 0.00999999977 : f32
    %18 = vector.broadcast %cst_13 : f32 to vector<32x150xf32>
    %19 = arith.mulf %18, %15 : vector<32x150xf32>
    %20 = arith.select %17, %15, %19 : vector<32x150xi1>, vector<32x150xf32>
    %c0_14 = arith.constant 0 : index
    %c0_15 = arith.constant 0 : index
    %21 = vector.load %arg6[%c0_14, %c0_15] : memref<150x100xf32, #tpu.memory_space<vmem>>, vector<150x100xf32>
    %cst_16 = arith.constant dense<0.000000e+00> : vector<32x100xf32>
    %22 = tpu.matmul %20, %21, %cst_16 {dimension_numbers = #tpu.dot_dimension_numbers<[1], [0], [0], [1], [0, 0, 1, 1], [], []>} : vector<32x150xf32>, vector<150x100xf32>, vector<32x100xf32> -> vector<32x100xf32>
    %c0_17 = arith.constant 0 : index
    %c0_18 = arith.constant 0 : index
    %23 = vector.load %arg7[%c0_17, %c0_18] : memref<1x100xf32, #tpu.memory_space<vmem>>, vector<1x100xf32>
    %24 = vector.broadcast %23 : vector<1x100xf32> to vector<32x100xf32>
    %25 = arith.addf %22, %24 : vector<32x100xf32>
    %cst_19 = arith.constant 0.000000e+00 : f32
    %26 = vector.broadcast %cst_19 : f32 to vector<32x100xf32>
    %27 = arith.cmpf ogt, %25, %26 : vector<32x100xf32>
    %cst_20 = arith.constant 0.00999999977 : f32
    %28 = vector.broadcast %cst_20 : f32 to vector<32x100xf32>
    %29 = arith.mulf %28, %25 : vector<32x100xf32>
    %30 = arith.select %27, %25, %29 : vector<32x100xi1>, vector<32x100xf32>
    %c0_21 = arith.constant 0 : index
    %c0_22 = arith.constant 0 : index
    %31 = vector.load %arg8[%c0_21, %c0_22] : memref<100x128xf32, #tpu.memory_space<vmem>>, vector<100x128xf32>
    %cst_23 = arith.constant dense<0.000000e+00> : vector<32x128xf32>
    %32 = tpu.matmul %30, %31, %cst_23 {dimension_numbers = #tpu.dot_dimension_numbers<[1], [0], [0], [1], [0, 0, 1, 1], [], []>} : vector<32x100xf32>, vector<100x128xf32>, vector<32x128xf32> -> vector<32x128xf32>
    %c0_24 = arith.constant 0 : index
    %c0_25 = arith.constant 0 : index
    %33 = vector.load %arg9[%c0_24, %c0_25] : memref<1x128xf32, #tpu.memory_space<vmem>>, vector<1x128xf32>
    %34 = vector.broadcast %33 : vector<1x128xf32> to vector<32x128xf32>
    %35 = arith.addf %32, %34 : vector<32x128xf32>
    %c0_26 = arith.constant 0 : index
    %c0_27 = arith.constant 0 : index
    %36 = vector.load %arg10[%c0_26, %c0_27] : memref<32x128xf32, #tpu.memory_space<vmem>>, vector<32x128xf32>
    tpu.vector_store %arg10[%c0_26, %c0_27], %35 {strides = array<i32>} : memref<32x128xf32, #tpu.memory_space<vmem>>, vector<32x128xf32>,
    return
  }
  func.func @transform_0(%arg0: i32) -> (i32, i32) {
    %c0_i32 = arith.constant 0 : i32
    %c0_i32_0 = arith.constant 0 : i32
    return %arg0, %c0_i32 : i32, i32
  }
  func.func @transform_1(%arg0: i32) -> (i32, i32) {
    %c0_i32 = arith.constant 0 : i32
    %c0_i32_0 = arith.constant 0 : i32
    %c0_i32_1 = arith.constant 0 : i32
    return %c0_i32, %c0_i32_0 : i32, i32
  }
  func.func @transform_2(%arg0: i32) -> (i32, i32) {
    %c0_i32 = arith.constant 0 : i32
    %c0_i32_0 = arith.constant 0 : i32
    %c0_i32_1 = arith.constant 0 : i32
    return %c0_i32, %c0_i32_0 : i32, i32
  }
  func.func @transform_3(%arg0: i32) -> (i32, i32) {
    %c0_i32 = arith.constant 0 : i32
    %c0_i32_0 = arith.constant 0 : i32
    %c0_i32_1 = arith.constant 0 : i32
    return %c0_i32, %c0_i32_0 : i32, i32
  }
  func.func @transform_4(%arg0: i32) -> (i32, i32) {
    %c0_i32 = arith.constant 0 : i32
    %c0_i32_0 = arith.constant 0 : i32
    %c0_i32_1 = arith.constant 0 : i32
    return %c0_i32, %c0_i32_0 : i32, i32
  }
  func.func @transform_5(%arg0: i32) -> (i32, i32) {
    %c0_i32 = arith.constant 0 : i32
    %c0_i32_0 = arith.constant 0 : i32
    %c0_i32_1 = arith.constant 0 : i32
    return %c0_i32, %c0_i32_0 : i32, i32
  }
  func.func @transform_6(%arg0: i32) -> (i32, i32) {
    %c0_i32 = arith.constant 0 : i32
    %c0_i32_0 = arith.constant 0 : i32
    %c0_i32_1 = arith.constant 0 : i32
    return %c0_i32, %c0_i32_0 : i32, i32
  }
  func.func @transform_7(%arg0: i32) -> (i32, i32) {
    %c0_i32 = arith.constant 0 : i32
    %c0_i32_0 = arith.constant 0 : i32
    %c0_i32_1 = arith.constant 0 : i32
    return %c0_i32, %c0_i32_0 : i32, i32
  }
  func.func @transform_8(%arg0: i32) -> (i32, i32) {
    %c0_i32 = arith.constant 0 : i32
    %c0_i32_0 = arith.constant 0 : i32
    %c0_i32_1 = arith.constant 0 : i32
    return %c0_i32, %c0_i32_0 : i32, i32
  }
  func.func @transform_9(%arg0: i32) -> (i32, i32) {
    %c0_i32 = arith.constant 0 : i32
    %c0_i32_0 = arith.constant 0 : i32
    return %arg0, %c0_i32 : i32, i32
  }
}

module attributes {stable_mosaic.version = 11 : i64} {
  func.func @dqn_kernel(%arg0: i32, %arg1: memref<32x32xf32, #tpu.memory_space<vmem>>, %arg2: memref<32x64xf32, #tpu.memory_space<vmem>>, %arg3: memref<1x64xf32, #tpu.memory_space<vmem>>, %arg4: memref<64x150xf32, #tpu.memory_space<vmem>>, %arg5: memref<1x150xf32, #tpu.memory_space<vmem>>, %arg6: memref<150x100xf32, #tpu.memory_space<vmem>>, %arg7: memref<1x100xf32, #tpu.memory_space<vmem>>, %arg8: memref<100x128xf32, #tpu.memory_space<vmem>>, %arg9: memref<1x128xf32, #tpu.memory_space<vmem>>, %arg10: memref<32x128xf32, #tpu.memory_space<vmem>>) attributes {dimension_semantics = [#tpu.dimension_semantics<parallel>], iteration_bounds = array<i64: 2>, scalar_prefetch = 0 : i64, scratch_operands = 0 : i64, tpu.core_type = #tpu.core_type<tc>, window_params = [{transform_indices = @transform_0, window_bounds = array<i64: 32, 32>}, {pipeline_mode = #tpu.pipeline_mode<synchronous>, transform_indices = @transform_1, window_bounds = array<i64: 32, 64>}, {pipeline_mode = #tpu.pipeline_mode<synchronous>, transform_indices = @transform_2, window_bounds = array<i64: 1, 64>}, {pipeline_mode = #tpu.pipeline_mode<synchronous>, transform_indices = @transform_3, window_bounds = array<i64: 64, 150>}, {pipeline_mode = #tpu.pipeline_mode<synchronous>, transform_indices = @transform_4, window_bounds = array<i64: 1, 150>}, {pipeline_mode = #tpu.pipeline_mode<synchronous>, transform_indices = @transform_5, window_bounds = array<i64: 150, 100>}, {pipeline_mode = #tpu.pipeline_mode<synchronous>, transform_indices = @transform_6, window_bounds = array<i64: 1, 100>}, {pipeline_mode = #tpu.pipeline_mode<synchronous>, transform_indices = @transform_7, window_bounds = array<i64: 100, 128>}, {pipeline_mode = #tpu.pipeline_mode<synchronous>, transform_indices = @transform_8, window_bounds = array<i64: 1, 128>}, {transform_indices = @transform_9, window_bounds = array<i64: 32, 128>}]} {
    %c0 = arith.constant 0 : index
    %c0_0 = arith.constant 0 : index
    %0 = vector.load %arg1[%c0, %c0_0] : memref<32x32xf32, #tpu.memory_space<vmem>>, vector<32x32xf32>
    %c0_1 = arith.constant 0 : index
    %c0_2 = arith.constant 0 : index
    %1 = vector.load %arg2[%c0_1, %c0_2] : memref<32x64xf32, #tpu.memory_space<vmem>>, vector<32x64xf32>
    %cst = arith.constant dense<0.000000e+00> : vector<32x64xf32>
    %2 = tpu.matmul %0, %1, %cst {dimension_numbers = #tpu.dot_dimension_numbers<[1], [0], [0], [1], [0, 0, 1, 1], [], []>} : vector<32x32xf32>, vector<32x64xf32>, vector<32x64xf32> -> vector<32x64xf32>
    %c0_3 = arith.constant 0 : index
    %c0_4 = arith.constant 0 : index
    %3 = vector.load %arg3[%c0_3, %c0_4] : memref<1x64xf32, #tpu.memory_space<vmem>>, vector<1x64xf32>
    %4 = vector.broadcast %3 : vector<1x64xf32> to vector<32x64xf32>
    %5 = arith.addf %2, %4 : vector<32x64xf32>
    %cst_5 = arith.constant 0.000000e+00 : f32
    %6 = vector.broadcast %cst_5 : f32 to vector<32x64xf32>
    %7 = arith.cmpf ogt, %5, %6 : vector<32x64xf32>
    %cst_6 = arith.constant 0.00999999977 : f32
    %8 = vector.broadcast %cst_6 : f32 to vector<32x64xf32>
    %9 = arith.mulf %8, %5 : vector<32x64xf32>
    %10 = arith.select %7, %5, %9 : vector<32x64xi1>, vector<32x64xf32>
    %c0_7 = arith.constant 0 : index
    %c0_8 = arith.constant 0 : index
    %11 = vector.load %arg4[%c0_7, %c0_8] : memref<64x150xf32, #tpu.memory_space<vmem>>, vector<64x150xf32>
    %cst_9 = arith.constant dense<0.000000e+00> : vector<32x150xf32>
    %12 = tpu.matmul %10, %11, %cst_9 {dimension_numbers = #tpu.dot_dimension_numbers<[1], [0], [0], [1], [0, 0, 1, 1], [], []>} : vector<32x64xf32>, vector<64x150xf32>, vector<32x150xf32> -> vector<32x150xf32>
    %c0_10 = arith.constant 0 : index
    %c0_11 = arith.constant 0 : index
    %13 = vector.load %arg5[%c0_10, %c0_11] : memref<1x150xf32, #tpu.memory_space<vmem>>, vector<1x150xf32>
    %14 = vector.broadcast %13 : vector<1x150xf32> to vector<32x150xf32>
    %15 = arith.addf %12, %14 : vector<32x150xf32>
    %cst_12 = arith.constant 0.000000e+00 : f32
    %16 = vector.broadcast %cst_12 : f32 to vector<32x150xf32>
    %17 = arith.cmpf ogt, %15, %16 : vector<32x150xf32>
    %cst_13 = arith.constant 0.00999999977 : f32
    %18 = vector.broadcast %cst_13 : f32 to vector<32x150xf32>
    %19 = arith.mulf %18, %15 : vector<32x150xf32>
    %20 = arith.select %17, %15, %19 : vector<32x150xi1>, vector<32x150xf32>
    %c0_14 = arith.constant 0 : index
    %c0_15 = arith.constant 0 : index
    %21 = vector.load %arg6[%c0_14, %c0_15] : memref<150x100xf32, #tpu.memory_space<vmem>>, vector<150x100xf32>
    %cst_16 = arith.constant dense<0.000000e+00> : vector<32x100xf32>
    %22 = tpu.matmul %20, %21, %cst_16 {dimension_numbers = #tpu.dot_dimension_numbers<[1], [0], [0], [1], [0, 0, 1, 1], [], []>} : vector<32x150xf32>, vector<150x100xf32>, vector<32x100xf32> -> vector<32x100xf32>
    %c0_17 = arith.constant 0 : index
    %c0_18 = arith.constant 0 : index
    %23 = vector.load %arg7[%c0_17, %c0_18] : memref<1x100xf32, #tpu.memory_space<vmem>>, vector<1x100xf32>
    %24 = vector.broadcast %23 : vector<1x100xf32> to vector<32x100xf32>
    %25 = arith.addf %22, %24 : vector<32x100xf32>
    %cst_19 = arith.constant 0.000000e+00 : f32
    %26 = vector.broadcast %cst_19 : f32 to vector<32x100xf32>
    %27 = arith.cmpf ogt, %25, %26 : vector<32x100xf32>
    %cst_20 = arith.constant 0.00999999977 : f32
    %28 = vector.broadcast %cst_20 : f32 to vector<32x100xf32>
    %29 = arith.mulf %28, %25 : vector<32x100xf32>
    %30 = arith.select %27, %25, %29 : vector<32x100xi1>, vector<32x100xf32>
    %c0_21 = arith.constant 0 : index
    %c0_22 = arith.constant 0 : index
    %31 = vector.load %arg8[%c0_21, %c0_22] : memref<100x128xf32, #tpu.memory_space<vmem>>, vector<100x128xf32>
    %cst_23 = arith.constant dense<0.000000e+00> : vector<32x128xf32>
    %32 = tpu.matmul %30, %31, %cst_23 {dimension_numbers = #tpu.dot_dimension_numbers<[1], [0], [0], [1], [0, 0, 1, 1], [], []>} : vector<32x100xf32>, vector<100x128xf32>, vector<32x128xf32> -> vector<32x128xf32>
    %c0_24 = arith.constant 0 : index
    %c0_25 = arith.constant 0 : index
    %33 = vector.load %arg9[%c0_24, %c0_25] : memref<1x128xf32, #tpu.memory_space<vmem>>, vector<1x128xf32>
    %34 = vector.broadcast %33 : vector<1x128xf32> to vector<32x128xf32>
    %35 = arith.addf %32, %34 : vector<32x128xf32>
    %c0_26 = arith.constant 0 : index
    %c0_27 = arith.constant 0 : index
    %36 = vector.load %arg10[%c0_26, %c0_27] : memref<32x128xf32, #tpu.memory_space<vmem>>, vector<32x128xf32>
    tpu.vector_store %arg10[%c0_26, %c0_27], %35 {strides = array<i32>} : memref<32x128xf32, #tpu.memory_space<vmem>>, vector<32x128xf32>,
    return
  }
  func.func @transform_0(%arg0: i32) -> (i32, i32) {
    %c0_i32 = arith.constant 0 : i32
    %c0_i32_0 = arith.constant 0 : i32
    return %arg0, %c0_i32 : i32, i32
  }
  func.func @transform_1(%arg0: i32) -> (i32, i32) {
    %c0_i32 = arith.constant 0 : i32
    %c0_i32_0 = arith.constant 0 : i32
    %c0_i32_1 = arith.constant 0 : i32
    return %c0_i32, %c0_i32_0 : i32, i32
  }
  func.func @transform_2(%arg0: i32) -> (i32, i32) {
    %c0_i32 = arith.constant 0 : i32
    %c0_i32_0 = arith.constant 0 : i32
    %c0_i32_1 = arith.constant 0 : i32
    return %c0_i32, %c0_i32_0 : i32, i32
  }
  func.func @transform_3(%arg0: i32) -> (i32, i32) {
    %c0_i32 = arith.constant 0 : i32
    %c0_i32_0 = arith.constant 0 : i32
    %c0_i32_1 = arith.constant 0 : i32
    return %c0_i32, %c0_i32_0 : i32, i32
  }
  func.func @transform_4(%arg0: i32) -> (i32, i32) {
    %c0_i32 = arith.constant 0 : i32
    %c0_i32_0 = arith.constant 0 : i32
    %c0_i32_1 = arith.constant 0 : i32
    return %c0_i32, %c0_i32_0 : i32, i32
  }
  func.func @transform_5(%arg0: i32) -> (i32, i32) {
    %c0_i32 = arith.constant 0 : i32
    %c0_i32_0 = arith.constant 0 : i32
    %c0_i32_1 = arith.constant 0 : i32
    return %c0_i32, %c0_i32_0 : i32, i32
  }
  func.func @transform_6(%arg0: i32) -> (i32, i32) {
    %c0_i32 = arith.constant 0 : i32
    %c0_i32_0 = arith.constant 0 : i32
    %c0_i32_1 = arith.constant 0 : i32
    return %c0_i32, %c0_i32_0 : i32, i32
  }
  func.func @transform_7(%arg0: i32) -> (i32, i32) {
    %c0_i32 = arith.constant 0 : i32
    %c0_i32_0 = arith.constant 0 : i32
    %c0_i32_1 = arith.constant 0 : i32
    return %c0_i32, %c0_i32_0 : i32, i32
  }
  func.func @transform_8(%arg0: i32) -> (i32, i32) {
    %c0_i32 = arith.constant 0 : i32
    %c0_i32_0 = arith.constant 0 : i32
    %c0_i32_1 = arith.constant 0 : i32
    return %c0_i32, %c0_i32_0 : i32, i32
  }
  func.func @transform_9(%arg0: i32) -> (i32, i32) {
    %c0_i32 = arith.constant 0 : i32
    %c0_i32_0 = arith.constant 0 : i32
    return %arg0, %c0_i32 : i32, i32
  }
}

</mosaic_0001>

<llo_original>
// kernel: tpu_custom_call.1
$region0: #{tpu_custom_call.1}
  #allocation0 [shape = 'u32[]', space=smem, size = 0x4, offset = 0x4, fixed_abs, tag = 'smem constant byte address 0x4 - core index']
  #allocation1 [shape = 'u32[72,128]{1,0:T(1,128)}', space=vmem, size = 0x9000, scoped, tag = 'internal scratch']
  %s0 = inlined_call_operand.vmem [shape: f32[64,32], index: 0, kind: input, shape index: {}]
  %s1 = inlined_call_operand.vmem [shape: f32[32,64], index: 1, kind: input, shape index: {}]
  %s2 = inlined_call_operand.vmem [shape: f32[1,64], index: 2, kind: input, shape index: {}]
  %s3 = inlined_call_operand.hbm [shape: f32[64,150], index: 3, kind: input, shape index: {}]
  %s4 = inlined_call_operand.vmem [shape: f32[1,150], index: 4, kind: input, shape index: {}]
  %s5 = inlined_call_operand.hbm [shape: f32[150,100], index: 5, kind: input, shape index: {}]
  %s6 = inlined_call_operand.vmem [shape: f32[1,100], index: 6, kind: input, shape index: {}]
  %s7 = inlined_call_operand.hbm [shape: f32[100,128], index: 7, kind: input, shape index: {}]
  %s8 = inlined_call_operand.vmem [shape: f32[1,128], index: 8, kind: input, shape index: {}]
  %s9 = inlined_call_operand.hbm [shape: f32[64,128], index: 9, kind: output, shape index: {}]
  %s10 = sld [smem:[#allocation0]]
  $region81: #{tpu_custom_call.1} parent=0
    _
  %s12 = ssub.s32 1, %s10
  %s13 = scalar_select 0, %s12, %s10
  $region1: #{tpu_custom_call.1} parent=0
    #allocation2 [shape = 'u8[65536]{0}', space=vmem, size = 0x10000, scoped, tag = 'input window, operand 3, single buffered']
    #allocation3 [shape = 's32[2]{0}', space=sflag, size = 0x8, scoped, tag = 'scoped memory for tpu_custom_call.1']
    #allocation4 [shape = 's32[2]{0}', space=sflag, size = 0x8, scoped, tag = 'scoped memory for tpu_custom_call.1']
    #allocation5 [shape = 'u8[77824]{0}', space=vmem, size = 0x13000, scoped, tag = 'input window, operand 5, single buffered']
    #allocation6 [shape = 's32[1]{0}', space=sflag, size = 0x4, scoped, tag = 'scoped memory for tpu_custom_call.1']
    #allocation7 [shape = 'u8[53248]{0}', space=vmem, size = 0xd000, scoped, tag = 'input window, operand 7, single buffered']
    #allocation8 [shape = 'u8[32768]{0}', space=vmem, size = 0x8000, scoped, tag = 'output window, operand 0']
    %14 = vsyncpa [#allocation3], 0
    %15 = vsyncpa [#allocation6], 0
    %16 = vsyncpa [#allocation4], 0
    %s17 = scalar_lea.sflag [#allocation4], 1
    %18 = vsyncpa %s17, 0
    loop: start=0, step=1, limit=4
    $region2: #{tpu_custom_call.1} parent=1 // loop_pre_header
      _
    $region3: #{tpu_custom_call.1} parent=1 // loop_header
      %s20 = sphi 0, %s24
      %p21 = scmp.ge.s32.totalorder %s20, 4
      %s30 = sphi 0, %s32
      %s33 = sphi 0, %s30
      %s34 = sphi 0, %s33
      %s50 = sphi 0, %s34
      %s54 = sphi 0, %s54
      %s56 = sphi 0, %s54
      %s57 = sphi 0, %s56
      %s71 = sphi 0, %s57
      %s75 = sphi 0, %s75
      %s77 = sphi 0, %s75
      %s78 = sphi 0, %s77
      %s92 = sphi 0, %s78
      %s96 = sphi 0, %s96
      %s98 = sphi 0, %s96
      %s99 = sphi 0, %s98
      %s113 = sphi 0, %s99
      %s117 = sphi 0, %s117
      %s119 = sphi 0, %s117
      %s120 = sphi 0, %s119
      %s134 = sphi 0, %s120
      %s138 = sphi 0, %s138
      %s140 = sphi 0, %s138
      %s141 = sphi 0, %s140
      %s155 = sphi 0, %s141
      %s159 = sphi 0, %s159
      %s161 = sphi 0, %s159
      %s162 = sphi 0, %s161
      %s176 = sphi 0, %s162
      %s180 = sphi 0, %s180
      %s182 = sphi 0, %s180
      %s183 = sphi 0, %s182
      %s197 = sphi 0, %s183
      %s201 = sphi 0, %s201
      %s203 = sphi 0, %s201
      %s204 = sphi 0, %s203
      %s218 = sphi 0, %s204
      %s224 = sphi 0, %s226
      %s227 = sphi 0, %s224
      %s228 = sphi 0, %s227
      %s244 = sphi 0, %s228
    $region4: #{tpu_custom_call.1} parent=1 // loop_header_branch
      %23 = sbr.rel (%p21) target = $region8
    $region5: #{tpu_custom_call.1} parent=1 // loop_body
      %s25 = ssub.s32 %s20, 1
      %s26 = ssub.s32 %s20, 2
      %s27 = sadd.s32 %s20, 1
      %s28 = ssub.s32 %s20, %s27
      %p29 = scmp.eq.s32.totalorder %s28, 0
      %s31 = sadd.s32 %s30, 1
      %s32 = scalar_select %p29, %s30, %s31
      %p35 = pneg %p29
      %p36 = scmp.eq.s32.totalorder %s20, 1
      %p37 = por %p35, %p36
      %p38 = scmp.ne.s32.totalorder %s30, %s33
      %p39 = scmp.eq.s32.totalorder %s20, 0
      %p40 = por %p38, %p39
      %p41 = scmp.ne.s32.totalorder %s30, %s33
      %p42 = scmp.eq.s32.totalorder %s25, 1
      %p43 = por %p41, %p42
      %p44 = scmp.ne.s32.totalorder %s33, %s34
      %p45 = scmp.eq.s32.totalorder %s25, 0
      %p46 = por %p44, %p45
      %p47 = scmp.ne.s32.totalorder %s33, %s34
      %p48 = scmp.eq.s32.totalorder %s26, 1
      %p49 = por %p47, %p48
      %p51 = scmp.ne.s32.totalorder %s34, %s50
      %p52 = scmp.eq.s32.totalorder %s26, 0
      %p53 = por %p51, %p52
      %s55 = sadd.s32 %s54, 1
      %p58 = scmp.eq.s32.totalorder %s20, 1
      %p59 = scmp.ne.s32.totalorder %s54, %s56
      %p60 = scmp.eq.s32.totalorder %s20, 0
      %p61 = por %p59, %p60
      %p62 = scmp.ne.s32.totalorder %s54, %s56
      %p63 = scmp.eq.s32.totalorder %s25, 1
      %p64 = por %p62, %p63
      %p65 = scmp.ne.s32.totalorder %s56, %s57
      %p66 = scmp.eq.s32.totalorder %s25, 0
      %p67 = por %p65, %p66
      %p68 = scmp.ne.s32.totalorder %s56, %s57
      %p69 = scmp.eq.s32.totalorder %s26, 1
      %p70 = por %p68, %p69
      %p72 = scmp.ne.s32.totalorder %s57, %s71
      %p73 = scmp.eq.s32.totalorder %s26, 0
      %p74 = por %p72, %p73
      %s76 = sadd.s32 %s75, 1
      %p79 = scmp.eq.s32.totalorder %s20, 1
      %p80 = scmp.ne.s32.totalorder %s75, %s77
      %p81 = scmp.eq.s32.totalorder %s20, 0
      %p82 = por %p80, %p81
      %p83 = scmp.ne.s32.totalorder %s75, %s77
      %p84 = scmp.eq.s32.totalorder %s25, 1
      %p85 = por %p83, %p84
      %p86 = scmp.ne.s32.totalorder %s77, %s78
      %p87 = scmp.eq.s32.totalorder %s25, 0
      %p88 = por %p86, %p87
      %p89 = scmp.ne.s32.totalorder %s77, %s78
      %p90 = scmp.eq.s32.totalorder %s26, 1
      %p91 = por %p89, %p90
      %p93 = scmp.ne.s32.totalorder %s78, %s92
      %p94 = scmp.eq.s32.totalorder %s26, 0
      %p95 = por %p93, %p94
      %s97 = sadd.s32 %s96, 1
      %p100 = scmp.eq.s32.totalorder %s20, 1
      %p101 = scmp.ne.s32.totalorder %s96, %s98
      %p102 = scmp.eq.s32.totalorder %s20, 0
      %p103 = por %p101, %p102
      %p104 = scmp.ne.s32.totalorder %s96, %s98
      %p105 = scmp.eq.s32.totalorder %s25, 1
      %p106 = por %p104, %p105
      %p107 = scmp.ne.s32.totalorder %s98, %s99
      %p108 = scmp.eq.s32.totalorder %s25, 0
      %p109 = por %p107, %p108
      %p110 = scmp.ne.s32.totalorder %s98, %s99
      %p111 = scmp.eq.s32.totalorder %s26, 1
      %p112 = por %p110, %p111
      %p114 = scmp.ne.s32.totalorder %s99, %s113
      %p115 = scmp.eq.s32.totalorder %s26, 0
      %p116 = por %p114, %p115
      %s118 = sadd.s32 %s117, 1
      %p121 = scmp.eq.s32.totalorder %s20, 1
      %p122 = scmp.ne.s32.totalorder %s117, %s119
      %p123 = scmp.eq.s32.totalorder %s20, 0
      %p124 = por %p122, %p123
      %p125 = scmp.ne.s32.totalorder %s117, %s119
      %p126 = scmp.eq.s32.totalorder %s25, 1
      %p127 = por %p125, %p126
      %p128 = scmp.ne.s32.totalorder %s119, %s120
      %p129 = scmp.eq.s32.totalorder %s25, 0
      %p130 = por %p128, %p129
      %p131 = scmp.ne.s32.totalorder %s119, %s120
      %p132 = scmp.eq.s32.totalorder %s26, 1
      %p133 = por %p131, %p132
      %p135 = scmp.ne.s32.totalorder %s120, %s134
      %p136 = scmp.eq.s32.totalorder %s26, 0
      %p137 = por %p135, %p136
      %s139 = sadd.s32 %s138, 1
      %p142 = scmp.eq.s32.totalorder %s20, 1
      %p143 = scmp.ne.s32.totalorder %s138, %s140
      %p144 = scmp.eq.s32.totalorder %s20, 0
      %p145 = por %p143, %p144
      %p146 = scmp.ne.s32.totalorder %s138, %s140
      %p147 = scmp.eq.s32.totalorder %s25, 1
      %p148 = por %p146, %p147
      %p149 = scmp.ne.s32.totalorder %s140, %s141
      %p150 = scmp.eq.s32.totalorder %s25, 0
      %p151 = por %p149, %p150
      %p152 = scmp.ne.s32.totalorder %s140, %s141
      %p153 = scmp.eq.s32.totalorder %s26, 1
      %p154 = por %p152, %p153
      %p156 = scmp.ne.s32.totalorder %s141, %s155
      %p157 = scmp.eq.s32.totalorder %s26, 0
      %p158 = por %p156, %p157
      %s160 = sadd.s32 %s159, 1
      %p163 = scmp.eq.s32.totalorder %s20, 1
      %p164 = scmp.ne.s32.totalorder %s159, %s161
      %p165 = scmp.eq.s32.totalorder %s20, 0
      %p166 = por %p164, %p165
      %p167 = scmp.ne.s32.totalorder %s159, %s161
      %p168 = scmp.eq.s32.totalorder %s25, 1
      %p169 = por %p167, %p168
      %p170 = scmp.ne.s32.totalorder %s161, %s162
      %p171 = scmp.eq.s32.totalorder %s25, 0
      %p172 = por %p170, %p171
      %p173 = scmp.ne.s32.totalorder %s161, %s162
      %p174 = scmp.eq.s32.totalorder %s26, 1
      %p175 = por %p173, %p174
      %p177 = scmp.ne.s32.totalorder %s162, %s176
      %p178 = scmp.eq.s32.totalorder %s26, 0
      %p179 = por %p177, %p178
      %s181 = sadd.s32 %s180, 1
      %p184 = scmp.eq.s32.totalorder %s20, 1
      %p185 = scmp.ne.s32.totalorder %s180, %s182
      %p186 = scmp.eq.s32.totalorder %s20, 0
      %p187 = por %p185, %p186
      %p188 = scmp.ne.s32.totalorder %s180, %s182
      %p189 = scmp.eq.s32.totalorder %s25, 1
      %p190 = por %p188, %p189
      %p191 = scmp.ne.s32.totalorder %s182, %s183
      %p192 = scmp.eq.s32.totalorder %s25, 0
      %p193 = por %p191, %p192
      %p194 = scmp.ne.s32.totalorder %s182, %s183
      %p195 = scmp.eq.s32.totalorder %s26, 1
      %p196 = por %p194, %p195
      %p198 = scmp.ne.s32.totalorder %s183, %s197
      %p199 = scmp.eq.s32.totalorder %s26, 0
      %p200 = por %p198, %p199
      %s202 = sadd.s32 %s201, 1
      %p205 = scmp.eq.s32.totalorder %s20, 1
      %p206 = scmp.ne.s32.totalorder %s201, %s203
      %p207 = scmp.eq.s32.totalorder %s20, 0
      %p208 = por %p206, %p207
      %p209 = scmp.ne.s32.totalorder %s201, %s203
      %p210 = scmp.eq.s32.totalorder %s25, 1
      %p211 = por %p209, %p210
      %p212 = scmp.ne.s32.totalorder %s203, %s204
      %p213 = scmp.eq.s32.totalorder %s25, 0
      %p214 = por %p212, %p213
      %p215 = scmp.ne.s32.totalorder %s203, %s204
      %p216 = scmp.eq.s32.totalorder %s26, 1
      %p217 = por %p215, %p216
      %p219 = scmp.ne.s32.totalorder %s204, %s218
      %p220 = scmp.eq.s32.totalorder %s26, 0
      %p221 = por %p219, %p220
      %s222 = ssub.s32 %s20, %s27
      %p223 = scmp.eq.s32.totalorder %s222, 0
      %s225 = sadd.s32 %s224, 1
      %s226 = scalar_select %p223, %s224, %s225
      %p229 = pneg %p223
      %p230 = scmp.eq.s32.totalorder %s20, 1
      %p231 = por %p229, %p230
      %p232 = scmp.ne.s32.totalorder %s224, %s227
      %p233 = scmp.eq.s32.totalorder %s20, 0
      %p234 = por %p232, %p233
      %p235 = scmp.ne.s32.totalorder %s224, %s227
      %p236 = scmp.eq.s32.totalorder %s25, 1
      %p237 = por %p235, %p236
      %p238 = scmp.ne.s32.totalorder %s227, %s228
      %p239 = scmp.eq.s32.totalorder %s25, 0
      %p240 = por %p238, %p239
      %p241 = scmp.ne.s32.totalorder %s227, %s228
      %p242 = scmp.eq.s32.totalorder %s26, 1
      %p243 = por %p241, %p242
      %p245 = scmp.ne.s32.totalorder %s228, %s244
      %p246 = scmp.eq.s32.totalorder %s26, 0
      %p247 = por %p245, %p246
      %p248 = scmp.le.s32.totalorder 1, %s20
      %p249 = scmp.lt.s32.totalorder %s20, 3
      %p250 = pnand %p248, %p249
      %p251 = pneg %p250
      // Predicated region
      $region9: #{tpu_custom_call.1} parent=5 // pred_check
        _
      $region10: #{tpu_custom_call.1} parent=5 // pred_check_branch
        %253 = sbr.rel (%p250) target = $region12
      $region11: #{tpu_custom_call.1} parent=5 // pred_region
        %s254 = ssub.s32 %s20, 1
        // Predicated region
        $region13: #{tpu_custom_call.1} parent=11 // pred_check
          %p255 = pneg %p67
        $region14: #{tpu_custom_call.1} parent=11 // pred_check_branch
          %257 = sbr.rel (%p255) target = $region16
        $region15: #{tpu_custom_call.1} parent=11 // pred_region
          _
        $region16: #{tpu_custom_call.1} parent=11 // pred_fallthru
          _
        // Predicated region
        $region17: #{tpu_custom_call.1} parent=11 // pred_check
          %p258 = pneg %p88
        $region18: #{tpu_custom_call.1} parent=11 // pred_check_branch
          %260 = sbr.rel (%p258) target = $region20
        $region19: #{tpu_custom_call.1} parent=11 // pred_region
          _
        $region20: #{tpu_custom_call.1} parent=11 // pred_fallthru
          _
        // Predicated region
        $region21: #{tpu_custom_call.1} parent=11 // pred_check
          %p261 = pneg %p109
        $region22: #{tpu_custom_call.1} parent=11 // pred_check_branch
          %263 = sbr.rel (%p261) target = $region24
        $region23: #{tpu_custom_call.1} parent=11 // pred_region
          %265 = vsyncadd [#allocation3], 0
          %s266 = sshll.u32 %s3, 4
          %s267 = int_to_ptr.hbm [resolvable:$true] %s266
          %s268 = sshll.u32 [#allocation2], 4
          %s269 = int_to_ptr.vmem [resolvable:$true] %s268
          %274 = dma.hbm_to_vmem [thread:$0]  %s267, 2048, %s269, [#allocation3], 256, 256, 16
        $region24: #{tpu_custom_call.1} parent=11 // pred_fallthru
          _
        // Predicated region
        $region25: #{tpu_custom_call.1} parent=11 // pred_check
          %p275 = pneg %p130
        $region26: #{tpu_custom_call.1} parent=11 // pred_check_branch
          %277 = sbr.rel (%p275) target = $region28
        $region27: #{tpu_custom_call.1} parent=11 // pred_region
          _
        $region28: #{tpu_custom_call.1} parent=11 // pred_fallthru
          _
        // Predicated region
        $region29: #{tpu_custom_call.1} parent=11 // pred_check
          %p278 = pneg %p151
        $region30: #{tpu_custom_call.1} parent=11 // pred_check_branch
          %280 = sbr.rel (%p278) target = $region32
        $region31: #{tpu_custom_call.1} parent=11 // pred_region
          %282 = vsyncadd [#allocation6], 0
          %s283 = sshll.u32 %s5, 4
          %s284 = int_to_ptr.hbm [resolvable:$true] %s283
          %s285 = sshll.u32 [#allocation5], 4
          %s286 = int_to_ptr.vmem [resolvable:$true] %s285
          %291 = dma.hbm_to_vmem [thread:$0]  %s284, 2432, %s286, [#allocation6], 128, 128, 8
        $region32: #{tpu_custom_call.1} parent=11 // pred_fallthru
          _
        // Predicated region
        $region33: #{tpu_custom_call.1} parent=11 // pred_check
          %p292 = pneg %p172
        $region34: #{tpu_custom_call.1} parent=11 // pred_check_branch
          %294 = sbr.rel (%p292) target = $region36
        $region35: #{tpu_custom_call.1} parent=11 // pred_region
          _
        $region36: #{tpu_custom_call.1} parent=11 // pred_fallthru
          _
        // Predicated region
        $region37: #{tpu_custom_call.1} parent=11 // pred_check
          %p295 = pneg %p193
        $region38: #{tpu_custom_call.1} parent=11 // pred_check_branch
          %297 = sbr.rel (%p295) target = $region40
        $region39: #{tpu_custom_call.1} parent=11 // pred_region
          %299 = vsyncadd [#allocation6], 0
          %s300 = sshll.u32 %s7, 4
          %s301 = int_to_ptr.hbm [resolvable:$true] %s300
          %s302 = sshll.u32 [#allocation7], 4
          %s303 = int_to_ptr.vmem [resolvable:$true] %s302
          %308 = dma.hbm_to_vmem [thread:$0]  %s301, 1664, %s303, [#allocation6], 128, 128, 8
        $region40: #{tpu_custom_call.1} parent=11 // pred_fallthru
          _
        // Predicated region
        $region41: #{tpu_custom_call.1} parent=11 // pred_check
          %p309 = pneg %p214
        $region42: #{tpu_custom_call.1} parent=11 // pred_check_branch
          %311 = sbr.rel (%p309) target = $region44
        $region43: #{tpu_custom_call.1} parent=11 // pred_region
          _
        $region44: #{tpu_custom_call.1} parent=11 // pred_fallthru
          _
      $region12: #{tpu_custom_call.1} parent=5 // pred_fallthru
        _
      %p312 = scmp.lt.s32.totalorder %s20, 2
      // Predicated region
      $region45: #{tpu_custom_call.1} parent=5 // pred_check
        %p313 = pneg %p312
      $region46: #{tpu_custom_call.1} parent=5 // pred_check_branch
        %315 = sbr.rel (%p313) target = $region48
      $region47: #{tpu_custom_call.1} parent=5 // pred_region
        // Predicated region
        $region49: #{tpu_custom_call.1} parent=47 // pred_check
          %p316 = pneg %p40
        $region50: #{tpu_custom_call.1} parent=47 // pred_check_branch
          %318 = sbr.rel (%p316) target = $region52
        $region51: #{tpu_custom_call.1} parent=47 // pred_region
          %s319 = smul.u32 4, %s20
          %p320 = scmp.lt.s32.totalorder %s319, 7
          %s321 = scalar_select %p320, %s319, 7
          %s322 = smul.addr %s321, 8
          %s323 = scalar_lea.vmem %s0, %s322
          %s324 = smul.u32 4, %s20
        $region52: #{tpu_custom_call.1} parent=47 // pred_fallthru
          _
      $region48: #{tpu_custom_call.1} parent=5 // pred_fallthru
        _
      %p325 = scmp.le.s32.totalorder 1, %s20
      %p326 = scmp.lt.s32.totalorder %s20, 3
      %p327 = pnand %p325, %p326
      %p328 = pneg %p327
      // Predicated region
      $region53: #{tpu_custom_call.1} parent=5 // pred_check
        _
      $region54: #{tpu_custom_call.1} parent=5 // pred_check_branch
        %330 = sbr.rel (%p327) target = $region56
      $region55: #{tpu_custom_call.1} parent=5 // pred_region
        %s331 = ssub.s32 %s20, 1
        // Predicated region
        $region57: #{tpu_custom_call.1} parent=55 // pred_check
          %p332 = pneg %p109
        $region58: #{tpu_custom_call.1} parent=55 // pred_check_branch
          %334 = sbr.rel (%p332) target = $region60
        $region59: #{tpu_custom_call.1} parent=55 // pred_region
          %336 = dma.done [#allocation3], 2048
        $region60: #{tpu_custom_call.1} parent=55 // pred_fallthru
          _
        // Predicated region
        $region61: #{tpu_custom_call.1} parent=55 // pred_check
          %p337 = pneg %p151
        $region62: #{tpu_custom_call.1} parent=55 // pred_check_branch
          %339 = sbr.rel (%p337) target = $region64
        $region63: #{tpu_custom_call.1} parent=55 // pred_region
          %341 = dma.done [#allocation6], 2432
        $region64: #{tpu_custom_call.1} parent=55 // pred_fallthru
          _
        // Predicated region
        $region65: #{tpu_custom_call.1} parent=55 // pred_check
          %p342 = pneg %p193
        $region66: #{tpu_custom_call.1} parent=55 // pred_check_branch
          %344 = sbr.rel (%p342) target = $region68
        $region67: #{tpu_custom_call.1} parent=55 // pred_region
          %346 = dma.done [#allocation6], 1664
        $region68: #{tpu_custom_call.1} parent=55 // pred_fallthru
          _
        %s347 = smul.u32 4, %s25
        %p348 = scmp.lt.s32.totalorder %s347, 7
        %s349 = scalar_select %p348, %s347, 7
        %s350 = smul.addr %s349, 8
        %s351 = scalar_lea.vmem %s0, %s350
        %p352 = pneg %p46
        %p353 = pneg %p43
        %p354 = pneg %p67
        %p355 = pneg %p64
        %p356 = pneg %p88
        %p357 = pneg %p85
        %p358 = pneg %p109
        %p359 = pneg %p106
        %p360 = pneg %p130
        %p361 = pneg %p127
        %p362 = pneg %p151
        %p363 = pneg %p148
        %p364 = pneg %p172
        %p365 = pneg %p169
        %p366 = pneg %p193
        %p367 = pneg %p190
        %p368 = pneg %p214
        %p369 = pneg %p211
        %p370 = pneg %p240
        %p371 = pneg %p237
        %s372 = sand.u32 %s227, 1
        %s373 = scalar_lea.sflag [#allocation4], %s372
        %s374 = sand.u32 %s227, 1
        %s375 = smul.addr %s374, 32
        %s376 = scalar_lea.vmem [#allocation8], %s375
        %s377 = smul.u32 4, %s25
        %p378 = scmp.lt.s32.totalorder %s377, 7
        %s379 = scalar_select %p378, %s377, 7
        %s380 = smul.addr %s379, 8
        %s381 = scalar_lea.vmem %s0, %s380
        %s382 = smul.u32 4, %s25
        %s383 = smul.u32 4, %s25
        %v384 = vld [vmem:[%s381] sm:$0xff]
        %v385 = vld [vmem:[%s381 + $0x8] sm:$0xff]
        %v386 = vld [vmem:[%s381 + $0x10] sm:$0xff]
        %v387 = vld [vmem:[%s381 + $0x18] sm:$0xff]
        %v388 = vld [vmem:[%s1] sm:$0xff]
        %v389 = vld [vmem:[%s1 + $0x8] sm:$0xff]
        %v390 = vld [vmem:[%s1 + $0x10] sm:$0xff]
        %v391 = vld [vmem:[%s1 + $0x18] sm:$0xff]
        %v392 = vld [vmem:[%s2] sm:$0x1]
        %v394 = vperm.slane %v392, 0
        %vm396 = vcmask 261120
        %v398 = vsel %vm396, %v384, 0
        %v401 = vsel %vm396, %v385, 0
        %v404 = vsel %vm396, %v386, 0
        %v407 = vsel %vm396, %v387, 0
        %409 = vmatpush.msra.mxu0 0.0
        %410 = vmatpush.msra.mxu0 0.0
        %411 = vmatpush.msra.mxu0 0.0
        %412 = vmatpush.msra.mxu0 0.0
        %413 = vmatpush.msra.mxu0 0.0
        %414 = vmatpush.msra.mxu0 0.0
        %415 = vmatpush.msra.mxu0 0.0
        %416 = vmatpush.msra.mxu0 0.0
        %417 = vmatpush.msra.mxu0 0.0
        %418 = vmatpush.msra.mxu0 0.0
        %419 = vmatpush.msra.mxu0 0.0
        %420 = vmatpush.msra.mxu0 0.0
        %421 = vmatpush.msra.mxu0 %v391
        %422 = vmatpush.msra.mxu0 %v390
        %423 = vmatpush.msra.mxu0 %v389
        %424 = vmatpush.msra.mxu0 %v388
        %425 = vmatmul.f32.gmra.mxu0 %v398
        %v426 = vpop.f32.mrf.mxu0
        %v427 = vadd.f32 %v394, %v426
        %428 = vmatmul.f32.gmra.mxu0 %v401
        %v429 = vpop.f32.mrf.mxu0
        %v430 = vadd.f32 %v394, %v429
        %431 = vmatmul.f32.gmra.mxu0 %v404
        %v432 = vpop.f32.mrf.mxu0
        %v433 = vadd.f32 %v394, %v432
        %434 = vmatmul.f32.gmra.mxu0 %v407
        %v435 = vpop.f32.mrf.mxu0
        %v436 = vadd.f32 %v394, %v435
        %437 = vdwg.mxu0
        %vm438 = vcmp.gt.f32.partialorder %v427, 0.0
        %vm439 = vcmp.gt.f32.partialorder %v430, 0.0
        %vm440 = vcmp.gt.f32.partialorder %v433, 0.0
        %vm441 = vcmp.gt.f32.partialorder %v436, 0.0
        %v442 = vmul.f32 %v427, 0.01
        %v443 = vmul.f32 %v430, 0.01
        %v444 = vmul.f32 %v433, 0.01
        %v445 = vmul.f32 %v436, 0.01
        %v446 = vsel %vm438, %v427, %v442
        %v447 = vsel %vm439, %v430, %v443
        %v448 = vsel %vm440, %v433, %v444
        %v449 = vsel %vm441, %v436, %v445
        %v450 = vld [vmem:[#allocation2] sm:$0xff]
        %v451 = vld [vmem:[#allocation2 + $0x8] sm:$0xff]
        %v452 = vld [vmem:[#allocation2 + $0x10] sm:$0xff]
        %v453 = vld [vmem:[#allocation2 + $0x18] sm:$0xff]
        %v454 = vld [vmem:[#allocation2 + $0x20] sm:$0xff]
        %v455 = vld [vmem:[#allocation2 + $0x28] sm:$0xff]
        %v456 = vld [vmem:[#allocation2 + $0x30] sm:$0xff]
        %v457 = vld [vmem:[#allocation2 + $0x38] sm:$0xff]
        %v458 = vld [vmem:[#allocation2 + $0x40] sm:$0xff]
        %v459 = vld [vmem:[#allocation2 + $0x48] sm:$0xff]
        %v460 = vld [vmem:[#allocation2 + $0x50] sm:$0xff]
        %v461 = vld [vmem:[#allocation2 + $0x58] sm:$0xff]
        %v462 = vld [vmem:[#allocation2 + $0x60] sm:$0xff]
        %v463 = vld [vmem:[#allocation2 + $0x68] sm:$0xff]
        %v464 = vld [vmem:[#allocation2 + $0x70] sm:$0xff]
        %v465 = vld [vmem:[#allocation2 + $0x78] sm:$0xff]
        %v466 = vld [vmem:[%s4] sm:$0x3]
        %v468 = vperm.slane %v466, 0
        %v469 = vperm.slane %v466, 1
        %vm472 = vcmask 523264
        %v474 = vsel %vm472, %v446, 0
        %v477 = vsel %vm472, %v447, 0
        %v480 = vsel %vm472, %v448, 0
        %v483 = vsel %vm472, %v449, 0
        %485 = vmatpush.msra.mxu0 0.0
        %486 = vmatpush.msra.mxu0 0.0
        %487 = vmatpush.msra.mxu0 0.0
        %488 = vmatpush.msra.mxu0 0.0
        %489 = vmatpush.msra.mxu0 0.0
        %490 = vmatpush.msra.mxu0 0.0
        %491 = vmatpush.msra.mxu0 0.0
        %492 = vmatpush.msra.mxu0 0.0
        %493 = vmatpush.msra.mxu0 %v464
        %494 = vmatpush.msra.mxu0 %v462
        %495 = vmatpush.msra.mxu0 %v460
        %496 = vmatpush.msra.mxu0 %v458
        %497 = vmatpush.msra.mxu0 %v456
        %498 = vmatpush.msra.mxu0 %v454
        %499 = vmatpush.msra.mxu0 %v452
        %500 = vmatpush.msra.mxu0 %v450
        %501 = vmatmul.f32.gmra.mxu0 %v474
        %v502 = vpop.f32.mrf.mxu0
        %v503 = vadd.f32 %v468, %v502
        %504 = vmatmul.f32.gmra.mxu0 %v477
        %v505 = vpop.f32.mrf.mxu0
        %v506 = vadd.f32 %v468, %v505
        %507 = vmatmul.f32.gmra.mxu0 %v480
        %v508 = vpop.f32.mrf.mxu0
        %v509 = vadd.f32 %v468, %v508
        %510 = vmatmul.f32.gmra.mxu0 %v483
        %v511 = vpop.f32.mrf.mxu0
        %v512 = vadd.f32 %v468, %v511
        %513 = vdwg.mxu0
        %514 = vmatpush.msra.mxu0 0.0
        %515 = vmatpush.msra.mxu0 0.0
        %516 = vmatpush.msra.mxu0 0.0
        %517 = vmatpush.msra.mxu0 0.0
        %518 = vmatpush.msra.mxu0 0.0
        %519 = vmatpush.msra.mxu0 0.0
        %520 = vmatpush.msra.mxu0 0.0
        %521 = vmatpush.msra.mxu0 0.0
        %522 = vmatpush.msra.mxu0 %v465
        %523 = vmatpush.msra.mxu0 %v463
        %524 = vmatpush.msra.mxu0 %v461
        %525 = vmatpush.msra.mxu0 %v459
        %526 = vmatpush.msra.mxu0 %v457
        %527 = vmatpush.msra.mxu0 %v455
        %528 = vmatpush.msra.mxu0 %v453
        %529 = vmatpush.msra.mxu0 %v451
        %530 = vmatmul.f32.gmra.mxu0 %v474
        %v531 = vpop.f32.mrf.mxu0
        %v532 = vadd.f32 %v469, %v531
        %533 = vmatmul.f32.gmra.mxu0 %v477
        %v534 = vpop.f32.mrf.mxu0
        %v535 = vadd.f32 %v469, %v534
        %536 = vmatmul.f32.gmra.mxu0 %v480
        %v537 = vpop.f32.mrf.mxu0
        %v538 = vadd.f32 %v469, %v537
        %539 = vmatmul.f32.gmra.mxu0 %v483
        %v540 = vpop.f32.mrf.mxu0
        %v541 = vadd.f32 %v469, %v540
        %542 = vdwg.mxu0
        %vm543 = vcmp.gt.f32.partialorder %v503, 0.0
        %vm544 = vcmp.gt.f32.partialorder %v532, 0.0
        %vm545 = vcmp.gt.f32.partialorder %v506, 0.0
        %vm546 = vcmp.gt.f32.partialorder %v535, 0.0
        %vm547 = vcmp.gt.f32.partialorder %v509, 0.0
        %vm548 = vcmp.gt.f32.partialorder %v538, 0.0
        %vm549 = vcmp.gt.f32.partialorder %v512, 0.0
        %vm550 = vcmp.gt.f32.partialorder %v541, 0.0
        %v551 = vmul.f32 %v503, 0.01
        %v552 = vmul.f32 %v532, 0.01
        %v553 = vmul.f32 %v506, 0.01
        %v554 = vmul.f32 %v535, 0.01
        %v555 = vmul.f32 %v509, 0.01
        %v556 = vmul.f32 %v538, 0.01
        %v557 = vmul.f32 %v512, 0.01
        %v558 = vmul.f32 %v541, 0.01
        %v559 = vsel %vm543, %v503, %v551
        %v560 = vsel %vm544, %v532, %v552
        %v561 = vsel %vm545, %v506, %v553
        %v562 = vsel %vm546, %v535, %v554
        %v563 = vsel %vm547, %v509, %v555
        %v564 = vsel %vm548, %v538, %v556
        %v565 = vsel %vm549, %v512, %v557
        %v566 = vsel %vm550, %v541, %v558
        %v567 = vld [vmem:[#allocation5] sm:$0xff]
        %v568 = vld [vmem:[#allocation5 + $0x8] sm:$0xff]
        %v569 = vld [vmem:[#allocation5 + $0x10] sm:$0xff]
        %v570 = vld [vmem:[#allocation5 + $0x18] sm:$0xff]
        %v571 = vld [vmem:[#allocation5 + $0x20] sm:$0xff]
        %v572 = vld [vmem:[#allocation5 + $0x28] sm:$0xff]
        %v573 = vld [vmem:[#allocation5 + $0x30] sm:$0xff]
        %v574 = vld [vmem:[#allocation5 + $0x38] sm:$0xff]
        %v575 = vld [vmem:[#allocation5 + $0x40] sm:$0xff]
        %v576 = vld [vmem:[#allocation5 + $0x48] sm:$0xff]
        %v577 = vld [vmem:[#allocation5 + $0x50] sm:$0xff]
        %v578 = vld [vmem:[#allocation5 + $0x58] sm:$0xff]
        %v579 = vld [vmem:[#allocation5 + $0x60] sm:$0xff]
        %v580 = vld [vmem:[#allocation5 + $0x68] sm:$0xff]
        %v581 = vld [vmem:[#allocation5 + $0x70] sm:$0xff]
        %v582 = vld [vmem:[#allocation5 + $0x78] sm:$0xff]
        %v583 = vld [vmem:[#allocation5 + $0x80] sm:$0xff]
        %v584 = vld [vmem:[#allocation5 + $0x88] sm:$0xff]
        %v585 = vld [vmem:[#allocation5 + $0x90] sm:$0x3f]
        %v586 = vld [vmem:[%s6] sm:$0x1]
        %v588 = vperm.slane %v586, 0
        %vm590 = vcmask 179200
        %v592 = vsel %vm590, %v560, 0
        %v595 = vsel %vm590, %v562, 0
        %v598 = vsel %vm590, %v564, 0
        %v601 = vsel %vm590, %v566, 0
        %vm603 = vcmask 1045504
        %v605 = vsel %vm603, %v585, 0
        %607 = vmatpush.msra.mxu0 %v582
        %608 = vmatpush.msra.mxu0 %v581
        %609 = vmatpush.msra.mxu0 %v580
        %610 = vmatpush.msra.mxu0 %v579
        %611 = vmatpush.msra.mxu0 %v578
        %612 = vmatpush.msra.mxu0 %v577
        %613 = vmatpush.msra.mxu0 %v576
        %614 = vmatpush.msra.mxu0 %v575
        %615 = vmatpush.msra.mxu0 %v574
        %616 = vmatpush.msra.mxu0 %v573
        %617 = vmatpush.msra.mxu0 %v572
        %618 = vmatpush.msra.mxu0 %v571
        %619 = vmatpush.msra.mxu0 %v570
        %620 = vmatpush.msra.mxu0 %v569
        %621 = vmatpush.msra.mxu0 %v568
        %622 = vmatpush.msra.mxu0 %v567
        %623 = vmatmul.f32.gmra.mxu0 %v559
        %v624 = vpop.f32.mrf.mxu0
        %v625 = vadd.f32 %v588, %v624
        %626 = vmatmul.f32.gmra.mxu0 %v561
        %v627 = vpop.f32.mrf.mxu0
        %v628 = vadd.f32 %v588, %v627
        %629 = vmatmul.f32.gmra.mxu0 %v563
        %v630 = vpop.f32.mrf.mxu0
        %v631 = vadd.f32 %v588, %v630
        %632 = vmatmul.f32.gmra.mxu0 %v565
        %v633 = vpop.f32.mrf.mxu0
        %v634 = vadd.f32 %v588, %v633
        %635 = vdwg.mxu0
        %636 = vmatpush.msra.mxu0 0.0
        %637 = vmatpush.msra.mxu0 0.0
        %638 = vmatpush.msra.mxu0 0.0
        %639 = vmatpush.msra.mxu0 0.0
        %640 = vmatpush.msra.mxu0 0.0
        %641 = vmatpush.msra.mxu0 0.0
        %642 = vmatpush.msra.mxu0 0.0
        %643 = vmatpush.msra.mxu0 0.0
        %644 = vmatpush.msra.mxu0 0.0
        %645 = vmatpush.msra.mxu0 0.0
        %646 = vmatpush.msra.mxu0 0.0
        %647 = vmatpush.msra.mxu0 0.0
        %648 = vmatpush.msra.mxu0 0.0
        %649 = vmatpush.msra.mxu0 %v605
        %650 = vmatpush.msra.mxu0 %v584
        %651 = vmatpush.msra.mxu0 %v583
        %652 = vmatmul.f32.gmra.mxu0 %v592
        %v653 = vpop.f32.mrf.mxu0
        %v654 = vadd.f32 %v625, %v653
        %655 = vmatmul.f32.gmra.mxu0 %v595
        %v656 = vpop.f32.mrf.mxu0
        %v657 = vadd.f32 %v628, %v656
        %658 = vmatmul.f32.gmra.mxu0 %v598
        %v659 = vpop.f32.mrf.mxu0
        %v660 = vadd.f32 %v631, %v659
        %661 = vmatmul.f32.gmra.mxu0 %v601
        %v662 = vpop.f32.mrf.mxu0
        %v663 = vadd.f32 %v634, %v662
        %664 = vdwg.mxu0
        %vm665 = vcmp.gt.f32.partialorder %v654, 0.0
        %vm666 = vcmp.gt.f32.partialorder %v657, 0.0
        %vm667 = vcmp.gt.f32.partialorder %v660, 0.0
        %vm668 = vcmp.gt.f32.partialorder %v663, 0.0
        %v669 = vmul.f32 %v654, 0.01
        %v670 = vmul.f32 %v657, 0.01
        %v671 = vmul.f32 %v660, 0.01
        %v672 = vmul.f32 %v663, 0.01
        %v673 = vsel %vm665, %v654, %v669
        %v674 = vsel %vm666, %v657, %v670
        %v675 = vsel %vm667, %v660, %v671
        %v676 = vsel %vm668, %v663, %v672
        %v677 = vld [vmem:[#allocation7] sm:$0xff]
        %v678 = vld [vmem:[#allocation7 + $0x8] sm:$0xff]
        %v679 = vld [vmem:[#allocation7 + $0x10] sm:$0xff]
        %v680 = vld [vmem:[#allocation7 + $0x18] sm:$0xff]
        %v681 = vld [vmem:[#allocation7 + $0x20] sm:$0xff]
        %v682 = vld [vmem:[#allocation7 + $0x28] sm:$0xff]
        %v683 = vld [vmem:[#allocation7 + $0x30] sm:$0xff]
        %v684 = vld [vmem:[#allocation7 + $0x38] sm:$0xff]
        %v685 = vld [vmem:[#allocation7 + $0x40] sm:$0xff]
        %v686 = vld [vmem:[#allocation7 + $0x48] sm:$0xff]
        %v687 = vld [vmem:[#allocation7 + $0x50] sm:$0xff]
        %v688 = vld [vmem:[#allocation7 + $0x58] sm:$0xff]
        %v689 = vld [vmem:[#allocation7 + $0x60] sm:$0xf]
        %v690 = vld [vmem:[%s8] sm:$0x1]
        %v692 = vperm.slane %v690, 0
        %vm694 = vcmask 818176
        %v696 = vsel %vm694, %v673, 0
        %v699 = vsel %vm694, %v674, 0
        %v702 = vsel %vm694, %v675, 0
        %v705 = vsel %vm694, %v676, 0
        %vm707 = vcmask 1043456
        %v709 = vsel %vm707, %v689, 0
        %711 = vmatpush.msra.mxu0 0.0
        %712 = vmatpush.msra.mxu0 0.0
        %713 = vmatpush.msra.mxu0 0.0
        %714 = vmatpush.msra.mxu0 %v709
        %715 = vmatpush.msra.mxu0 %v688
        %716 = vmatpush.msra.mxu0 %v687
        %717 = vmatpush.msra.mxu0 %v686
        %718 = vmatpush.msra.mxu0 %v685
        %719 = vmatpush.msra.mxu0 %v684
        %720 = vmatpush.msra.mxu0 %v683
        %721 = vmatpush.msra.mxu0 %v682
        %722 = vmatpush.msra.mxu0 %v681
        %723 = vmatpush.msra.mxu0 %v680
        %724 = vmatpush.msra.mxu0 %v679
        %725 = vmatpush.msra.mxu0 %v678
        %726 = vmatpush.msra.mxu0 %v677
        %727 = vmatmul.f32.gmra.mxu0 %v696
        %v728 = vpop.f32.mrf.mxu0
        %v729 = vadd.f32 %v692, %v728
        %730 = vmatmul.f32.gmra.mxu0 %v699
        %v731 = vpop.f32.mrf.mxu0
        %v732 = vadd.f32 %v692, %v731
        %733 = vmatmul.f32.gmra.mxu0 %v702
        %v734 = vpop.f32.mrf.mxu0
        %v735 = vadd.f32 %v692, %v734
        %736 = vmatmul.f32.gmra.mxu0 %v705
        %v737 = vpop.f32.mrf.mxu0
        %v738 = vadd.f32 %v692, %v737
        %739 = vdwg.mxu0
        %740 = vst [vmem:[%s376] sm:$0xff] %v729
        %741 = vst [vmem:[%s376 + $0x8] sm:$0xff] %v732
        %742 = vst [vmem:[%s376 + $0x10] sm:$0xff] %v735
        %743 = vst [vmem:[%s376 + $0x18] sm:$0xff] %v738
        %s744 = sand.u32 %s227, 1
        %s745 = scalar_lea.sflag [#allocation4], %s744
        %s746 = sand.u32 %s227, 1
        %s747 = smul.addr %s746, 32
        %s748 = scalar_lea.vmem [#allocation8], %s747
        // Predicated region
        $region69: #{tpu_custom_call.1} parent=55 // pred_check
          %p749 = pneg %p237
        $region70: #{tpu_custom_call.1} parent=55 // pred_check_branch
          %751 = sbr.rel (%p749) target = $region72
        $region71: #{tpu_custom_call.1} parent=55 // pred_region
          %s752 = smul.u32 4, %s25
          %754 = vsyncadd %s745, 0
          %s755 = smul.addr %s752, 8
          %s756 = scalar_lea.hbm %s9, %s755
          %s757 = sshll.u32 %s748, 4
          %s758 = int_to_ptr.vmem [resolvable:$true] %s757
          %s759 = sshll.u32 %s756, 4
          %s760 = int_to_ptr.hbm [resolvable:$true] %s759
          %765 = dma.vmem_to_hbm [thread:$0]  %s758, 512, %s760, %s745, 128, 128, 8
        $region72: #{tpu_custom_call.1} parent=55 // pred_fallthru
          _
      $region56: #{tpu_custom_call.1} parent=5 // pred_fallthru
        _
      %p766 = scmp.le.s32.totalorder 2, %s20
      // Predicated region
      $region73: #{tpu_custom_call.1} parent=5 // pred_check
        %p767 = pneg %p766
      $region74: #{tpu_custom_call.1} parent=5 // pred_check_branch
        %769 = sbr.rel (%p767) target = $region76
      $region75: #{tpu_custom_call.1} parent=5 // pred_region
        %s770 = ssub.s32 %s20, 2
        // Predicated region
        $region77: #{tpu_custom_call.1} parent=75 // pred_check
          %p771 = pneg %p243
        $region78: #{tpu_custom_call.1} parent=75 // pred_check_branch
          %773 = sbr.rel (%p771) target = $region80
        $region79: #{tpu_custom_call.1} parent=75 // pred_region
          %s774 = sand.u32 %s228, 1
          %s775 = scalar_lea.sflag [#allocation4], %s774
          %s776 = sand.u32 %s228, 1
          %s777 = smul.addr %s776, 32
          %s778 = scalar_lea.vmem [#allocation8], %s777
          %780 = dma.done %s775, 512
        $region80: #{tpu_custom_call.1} parent=75 // pred_fallthru
          _
      $region76: #{tpu_custom_call.1} parent=5 // pred_fallthru
        _
    $region6: #{tpu_custom_call.1} parent=1 // loop_footer
      %s24 = sadd.s32 1, %s20
    $region7: #{tpu_custom_call.1} parent=1 // loop_footer_branch
      %19 = sbr.rel target = $region3
    $region8: #{tpu_custom_call.1} parent=1 // loop_exit
      _
    %781 = vsyncpa [#allocation3], 1
    %s782 = scalar_lea.sflag [#allocation3], 1
    %783 = vsyncpa %s782, 1
    %784 = vsyncpa [#allocation6], 1
    %785 = vsyncpa [#allocation4], 1
    %s786 = scalar_lea.sflag [#allocation4], 1
    %787 = vsyncpa %s786, 1

// kernel: tpu_custom_call.1
$region0: #{tpu_custom_call.1}
  #allocation0 [shape = 'u32[]', space=smem, size = 0x4, offset = 0x4, fixed_abs, tag = 'smem constant byte address 0x4 - core index']
  #allocation1 [shape = 'u32[72,128]{1,0:T(1,128)}', space=vmem, size = 0x9000, scoped, tag = 'internal scratch']
  %s0 = inlined_call_operand.vmem [shape: f32[64,32], index: 0, kind: input, shape index: {}]
  %s1 = inlined_call_operand.vmem [shape: f32[32,64], index: 1, kind: input, shape index: {}]
  %s2 = inlined_call_operand.vmem [shape: f32[1,64], index: 2, kind: input, shape index: {}]
  %s3 = inlined_call_operand.hbm [shape: f32[64,150], index: 3, kind: input, shape index: {}]
  %s4 = inlined_call_operand.vmem [shape: f32[1,150], index: 4, kind: input, shape index: {}]
  %s5 = inlined_call_operand.hbm [shape: f32[150,100], index: 5, kind: input, shape index: {}]
  %s6 = inlined_call_operand.vmem [shape: f32[1,100], index: 6, kind: input, shape index: {}]
  %s7 = inlined_call_operand.hbm [shape: f32[100,128], index: 7, kind: input, shape index: {}]
  %s8 = inlined_call_operand.vmem [shape: f32[1,128], index: 8, kind: input, shape index: {}]
  %s9 = inlined_call_operand.hbm [shape: f32[64,128], index: 9, kind: output, shape index: {}]
  %s10 = sld [smem:[#allocation0]]
  $region81: #{tpu_custom_call.1} parent=0
    _
  %s12 = ssub.s32 1, %s10
  %s13 = scalar_select 0, %s12, %s10
  $region1: #{tpu_custom_call.1} parent=0
    #allocation2 [shape = 'u8[65536]{0}', space=vmem, size = 0x10000, scoped, tag = 'input window, operand 3, single buffered']
    #allocation3 [shape = 's32[2]{0}', space=sflag, size = 0x8, scoped, tag = 'scoped memory for tpu_custom_call.1']
    #allocation4 [shape = 's32[2]{0}', space=sflag, size = 0x8, scoped, tag = 'scoped memory for tpu_custom_call.1']
    #allocation5 [shape = 'u8[77824]{0}', space=vmem, size = 0x13000, scoped, tag = 'input window, operand 5, single buffered']
    #allocation6 [shape = 's32[1]{0}', space=sflag, size = 0x4, scoped, tag = 'scoped memory for tpu_custom_call.1']
    #allocation7 [shape = 'u8[53248]{0}', space=vmem, size = 0xd000, scoped, tag = 'input window, operand 7, single buffered']
    #allocation8 [shape = 'u8[32768]{0}', space=vmem, size = 0x8000, scoped, tag = 'output window, operand 0']
    %14 = vsyncpa [#allocation3], 0
    %15 = vsyncpa [#allocation6], 0
    %16 = vsyncpa [#allocation4], 0
    %s17 = scalar_lea.sflag [#allocation4], 1
    %18 = vsyncpa %s17, 0
    loop: start=0, step=1, limit=4
    $region2: #{tpu_custom_call.1} parent=1 // loop_pre_header
      _
    $region3: #{tpu_custom_call.1} parent=1 // loop_header
      %s20 = sphi 0, %s24
      %p21 = scmp.ge.s32.totalorder %s20, 4
      %s30 = sphi 0, %s32
      %s33 = sphi 0, %s30
      %s34 = sphi 0, %s33
      %s50 = sphi 0, %s34
      %s54 = sphi 0, %s54
      %s56 = sphi 0, %s54
      %s57 = sphi 0, %s56
      %s71 = sphi 0, %s57
      %s75 = sphi 0, %s75
      %s77 = sphi 0, %s75
      %s78 = sphi 0, %s77
      %s92 = sphi 0, %s78
      %s96 = sphi 0, %s96
      %s98 = sphi 0, %s96
      %s99 = sphi 0, %s98
      %s113 = sphi 0, %s99
      %s117 = sphi 0, %s117
      %s119 = sphi 0, %s117
      %s120 = sphi 0, %s119
      %s134 = sphi 0, %s120
      %s138 = sphi 0, %s138
      %s140 = sphi 0, %s138
      %s141 = sphi 0, %s140
      %s155 = sphi 0, %s141
      %s159 = sphi 0, %s159
      %s161 = sphi 0, %s159
      %s162 = sphi 0, %s161
      %s176 = sphi 0, %s162
      %s180 = sphi 0, %s180
      %s182 = sphi 0, %s180
      %s183 = sphi 0, %s182
      %s197 = sphi 0, %s183
      %s201 = sphi 0, %s201
      %s203 = sphi 0, %s201
      %s204 = sphi 0, %s203
      %s218 = sphi 0, %s204
      %s224 = sphi 0, %s226
      %s227 = sphi 0, %s224
      %s228 = sphi 0, %s227
      %s244 = sphi 0, %s228
    $region4: #{tpu_custom_call.1} parent=1 // loop_header_branch
      %23 = sbr.rel (%p21) target = $region8
    $region5: #{tpu_custom_call.1} parent=1 // loop_body
      %s25 = ssub.s32 %s20, 1
      %s26 = ssub.s32 %s20, 2
      %s27 = sadd.s32 %s20, 1
      %s28 = ssub.s32 %s20, %s27
      %p29 = scmp.eq.s32.totalorder %s28, 0
      %s31 = sadd.s32 %s30, 1
      %s32 = scalar_select %p29, %s30, %s31
      %p35 = pneg %p29
      %p36 = scmp.eq.s32.totalorder %s20, 1
      %p37 = por %p35, %p36
      %p38 = scmp.ne.s32.totalorder %s30, %s33
      %p39 = scmp.eq.s32.totalorder %s20, 0
      %p40 = por %p38, %p39
      %p41 = scmp.ne.s32.totalorder %s30, %s33
      %p42 = scmp.eq.s32.totalorder %s25, 1
      %p43 = por %p41, %p42
      %p44 = scmp.ne.s32.totalorder %s33, %s34
      %p45 = scmp.eq.s32.totalorder %s25, 0
      %p46 = por %p44, %p45
      %p47 = scmp.ne.s32.totalorder %s33, %s34
      %p48 = scmp.eq.s32.totalorder %s26, 1
      %p49 = por %p47, %p48
      %p51 = scmp.ne.s32.totalorder %s34, %s50
      %p52 = scmp.eq.s32.totalorder %s26, 0
      %p53 = por %p51, %p52
      %s55 = sadd.s32 %s54, 1
      %p58 = scmp.eq.s32.totalorder %s20, 1
      %p59 = scmp.ne.s32.totalorder %s54, %s56
      %p60 = scmp.eq.s32.totalorder %s20, 0
      %p61 = por %p59, %p60
      %p62 = scmp.ne.s32.totalorder %s54, %s56
      %p63 = scmp.eq.s32.totalorder %s25, 1
      %p64 = por %p62, %p63
      %p65 = scmp.ne.s32.totalorder %s56, %s57
      %p66 = scmp.eq.s32.totalorder %s25, 0
      %p67 = por %p65, %p66
      %p68 = scmp.ne.s32.totalorder %s56, %s57
      %p69 = scmp.eq.s32.totalorder %s26, 1
      %p70 = por %p68, %p69
      %p72 = scmp.ne.s32.totalorder %s57, %s71
      %p73 = scmp.eq.s32.totalorder %s26, 0
      %p74 = por %p72, %p73
      %s76 = sadd.s32 %s75, 1
      %p79 = scmp.eq.s32.totalorder %s20, 1
      %p80 = scmp.ne.s32.totalorder %s75, %s77
      %p81 = scmp.eq.s32.totalorder %s20, 0
      %p82 = por %p80, %p81
      %p83 = scmp.ne.s32.totalorder %s75, %s77
      %p84 = scmp.eq.s32.totalorder %s25, 1
      %p85 = por %p83, %p84
      %p86 = scmp.ne.s32.totalorder %s77, %s78
      %p87 = scmp.eq.s32.totalorder %s25, 0
      %p88 = por %p86, %p87
      %p89 = scmp.ne.s32.totalorder %s77, %s78
      %p90 = scmp.eq.s32.totalorder %s26, 1
      %p91 = por %p89, %p90
      %p93 = scmp.ne.s32.totalorder %s78, %s92
      %p94 = scmp.eq.s32.totalorder %s26, 0
      %p95 = por %p93, %p94
      %s97 = sadd.s32 %s96, 1
      %p100 = scmp.eq.s32.totalorder %s20, 1
      %p101 = scmp.ne.s32.totalorder %s96, %s98
      %p102 = scmp.eq.s32.totalorder %s20, 0
      %p103 = por %p101, %p102
      %p104 = scmp.ne.s32.totalorder %s96, %s98
      %p105 = scmp.eq.s32.totalorder %s25, 1
      %p106 = por %p104, %p105
      %p107 = scmp.ne.s32.totalorder %s98, %s99
      %p108 = scmp.eq.s32.totalorder %s25, 0
      %p109 = por %p107, %p108
      %p110 = scmp.ne.s32.totalorder %s98, %s99
      %p111 = scmp.eq.s32.totalorder %s26, 1
      %p112 = por %p110, %p111
      %p114 = scmp.ne.s32.totalorder %s99, %s113
      %p115 = scmp.eq.s32.totalorder %s26, 0
      %p116 = por %p114, %p115
      %s118 = sadd.s32 %s117, 1
      %p121 = scmp.eq.s32.totalorder %s20, 1
      %p122 = scmp.ne.s32.totalorder %s117, %s119
      %p123 = scmp.eq.s32.totalorder %s20, 0
      %p124 = por %p122, %p123
      %p125 = scmp.ne.s32.totalorder %s117, %s119
      %p126 = scmp.eq.s32.totalorder %s25, 1
      %p127 = por %p125, %p126
      %p128 = scmp.ne.s32.totalorder %s119, %s120
      %p129 = scmp.eq.s32.totalorder %s25, 0
      %p130 = por %p128, %p129
      %p131 = scmp.ne.s32.totalorder %s119, %s120
      %p132 = scmp.eq.s32.totalorder %s26, 1
      %p133 = por %p131, %p132
      %p135 = scmp.ne.s32.totalorder %s120, %s134
      %p136 = scmp.eq.s32.totalorder %s26, 0
      %p137 = por %p135, %p136
      %s139 = sadd.s32 %s138, 1
      %p142 = scmp.eq.s32.totalorder %s20, 1
      %p143 = scmp.ne.s32.totalorder %s138, %s140
      %p144 = scmp.eq.s32.totalorder %s20, 0
      %p145 = por %p143, %p144
      %p146 = scmp.ne.s32.totalorder %s138, %s140
      %p147 = scmp.eq.s32.totalorder %s25, 1
      %p148 = por %p146, %p147
      %p149 = scmp.ne.s32.totalorder %s140, %s141
      %p150 = scmp.eq.s32.totalorder %s25, 0
      %p151 = por %p149, %p150
      %p152 = scmp.ne.s32.totalorder %s140, %s141
      %p153 = scmp.eq.s32.totalorder %s26, 1
      %p154 = por %p152, %p153
      %p156 = scmp.ne.s32.totalorder %s141, %s155
      %p157 = scmp.eq.s32.totalorder %s26, 0
      %p158 = por %p156, %p157
      %s160 = sadd.s32 %s159, 1
      %p163 = scmp.eq.s32.totalorder %s20, 1
      %p164 = scmp.ne.s32.totalorder %s159, %s161
      %p165 = scmp.eq.s32.totalorder %s20, 0
      %p166 = por %p164, %p165
      %p167 = scmp.ne.s32.totalorder %s159, %s161
      %p168 = scmp.eq.s32.totalorder %s25, 1
      %p169 = por %p167, %p168
      %p170 = scmp.ne.s32.totalorder %s161, %s162
      %p171 = scmp.eq.s32.totalorder %s25, 0
      %p172 = por %p170, %p171
      %p173 = scmp.ne.s32.totalorder %s161, %s162
      %p174 = scmp.eq.s32.totalorder %s26, 1
      %p175 = por %p173, %p174
      %p177 = scmp.ne.s32.totalorder %s162, %s176
      %p178 = scmp.eq.s32.totalorder %s26, 0
      %p179 = por %p177, %p178
      %s181 = sadd.s32 %s180, 1
      %p184 = scmp.eq.s32.totalorder %s20, 1
      %p185 = scmp.ne.s32.totalorder %s180, %s182
      %p186 = scmp.eq.s32.totalorder %s20, 0
      %p187 = por %p185, %p186
      %p188 = scmp.ne.s32.totalorder %s180, %s182
      %p189 = scmp.eq.s32.totalorder %s25, 1
      %p190 = por %p188, %p189
      %p191 = scmp.ne.s32.totalorder %s182, %s183
      %p192 = scmp.eq.s32.totalorder %s25, 0
      %p193 = por %p191, %p192
      %p194 = scmp.ne.s32.totalorder %s182, %s183
      %p195 = scmp.eq.s32.totalorder %s26, 1
      %p196 = por %p194, %p195
      %p198 = scmp.ne.s32.totalorder %s183, %s197
      %p199 = scmp.eq.s32.totalorder %s26, 0
      %p200 = por %p198, %p199
      %s202 = sadd.s32 %s201, 1
      %p205 = scmp.eq.s32.totalorder %s20, 1
      %p206 = scmp.ne.s32.totalorder %s201, %s203
      %p207 = scmp.eq.s32.totalorder %s20, 0
      %p208 = por %p206, %p207
      %p209 = scmp.ne.s32.totalorder %s201, %s203
      %p210 = scmp.eq.s32.totalorder %s25, 1
      %p211 = por %p209, %p210
      %p212 = scmp.ne.s32.totalorder %s203, %s204
      %p213 = scmp.eq.s32.totalorder %s25, 0
      %p214 = por %p212, %p213
      %p215 = scmp.ne.s32.totalorder %s203, %s204
      %p216 = scmp.eq.s32.totalorder %s26, 1
      %p217 = por %p215, %p216
      %p219 = scmp.ne.s32.totalorder %s204, %s218
      %p220 = scmp.eq.s32.totalorder %s26, 0
      %p221 = por %p219, %p220
      %s222 = ssub.s32 %s20, %s27
      %p223 = scmp.eq.s32.totalorder %s222, 0
      %s225 = sadd.s32 %s224, 1
      %s226 = scalar_select %p223, %s224, %s225
      %p229 = pneg %p223
      %p230 = scmp.eq.s32.totalorder %s20, 1
      %p231 = por %p229, %p230
      %p232 = scmp.ne.s32.totalorder %s224, %s227
      %p233 = scmp.eq.s32.totalorder %s20, 0
      %p234 = por %p232, %p233
      %p235 = scmp.ne.s32.totalorder %s224, %s227
      %p236 = scmp.eq.s32.totalorder %s25, 1
      %p237 = por %p235, %p236
      %p238 = scmp.ne.s32.totalorder %s227, %s228
      %p239 = scmp.eq.s32.totalorder %s25, 0
      %p240 = por %p238, %p239
      %p241 = scmp.ne.s32.totalorder %s227, %s228
      %p242 = scmp.eq.s32.totalorder %s26, 1
      %p243 = por %p241, %p242
      %p245 = scmp.ne.s32.totalorder %s228, %s244
      %p246 = scmp.eq.s32.totalorder %s26, 0
      %p247 = por %p245, %p246
      %p248 = scmp.le.s32.totalorder 1, %s20
      %p249 = scmp.lt.s32.totalorder %s20, 3
      %p250 = pnand %p248, %p249
      %p251 = pneg %p250
      // Predicated region
      $region9: #{tpu_custom_call.1} parent=5 // pred_check
        _
      $region10: #{tpu_custom_call.1} parent=5 // pred_check_branch
        %253 = sbr.rel (%p250) target = $region12
      $region11: #{tpu_custom_call.1} parent=5 // pred_region
        %s254 = ssub.s32 %s20, 1
        // Predicated region
        $region13: #{tpu_custom_call.1} parent=11 // pred_check
          %p255 = pneg %p67
        $region14: #{tpu_custom_call.1} parent=11 // pred_check_branch
          %257 = sbr.rel (%p255) target = $region16
        $region15: #{tpu_custom_call.1} parent=11 // pred_region
          _
        $region16: #{tpu_custom_call.1} parent=11 // pred_fallthru
          _
        // Predicated region
        $region17: #{tpu_custom_call.1} parent=11 // pred_check
          %p258 = pneg %p88
        $region18: #{tpu_custom_call.1} parent=11 // pred_check_branch
          %260 = sbr.rel (%p258) target = $region20
        $region19: #{tpu_custom_call.1} parent=11 // pred_region
          _
        $region20: #{tpu_custom_call.1} parent=11 // pred_fallthru
          _
        // Predicated region
        $region21: #{tpu_custom_call.1} parent=11 // pred_check
          %p261 = pneg %p109
        $region22: #{tpu_custom_call.1} parent=11 // pred_check_branch
          %263 = sbr.rel (%p261) target = $region24
        $region23: #{tpu_custom_call.1} parent=11 // pred_region
          %265 = vsyncadd [#allocation3], 0
          %s266 = sshll.u32 %s3, 4
          %s267 = int_to_ptr.hbm [resolvable:$true] %s266
          %s268 = sshll.u32 [#allocation2], 4
          %s269 = int_to_ptr.vmem [resolvable:$true] %s268
          %274 = dma.hbm_to_vmem [thread:$0]  %s267, 2048, %s269, [#allocation3], 256, 256, 16
        $region24: #{tpu_custom_call.1} parent=11 // pred_fallthru
          _
        // Predicated region
        $region25: #{tpu_custom_call.1} parent=11 // pred_check
          %p275 = pneg %p130
        $region26: #{tpu_custom_call.1} parent=11 // pred_check_branch
          %277 = sbr.rel (%p275) target = $region28
        $region27: #{tpu_custom_call.1} parent=11 // pred_region
          _
        $region28: #{tpu_custom_call.1} parent=11 // pred_fallthru
          _
        // Predicated region
        $region29: #{tpu_custom_call.1} parent=11 // pred_check
          %p278 = pneg %p151
        $region30: #{tpu_custom_call.1} parent=11 // pred_check_branch
          %280 = sbr.rel (%p278) target = $region32
        $region31: #{tpu_custom_call.1} parent=11 // pred_region
          %282 = vsyncadd [#allocation6], 0
          %s283 = sshll.u32 %s5, 4
          %s284 = int_to_ptr.hbm [resolvable:$true] %s283
          %s285 = sshll.u32 [#allocation5], 4
          %s286 = int_to_ptr.vmem [resolvable:$true] %s285
          %291 = dma.hbm_to_vmem [thread:$0]  %s284, 2432, %s286, [#allocation6], 128, 128, 8
        $region32: #{tpu_custom_call.1} parent=11 // pred_fallthru
          _
        // Predicated region
        $region33: #{tpu_custom_call.1} parent=11 // pred_check
          %p292 = pneg %p172
        $region34: #{tpu_custom_call.1} parent=11 // pred_check_branch
          %294 = sbr.rel (%p292) target = $region36
        $region35: #{tpu_custom_call.1} parent=11 // pred_region
          _
        $region36: #{tpu_custom_call.1} parent=11 // pred_fallthru
          _
        // Predicated region
        $region37: #{tpu_custom_call.1} parent=11 // pred_check
          %p295 = pneg %p193
        $region38: #{tpu_custom_call.1} parent=11 // pred_check_branch
          %297 = sbr.rel (%p295) target = $region40
        $region39: #{tpu_custom_call.1} parent=11 // pred_region
          %299 = vsyncadd [#allocation6], 0
          %s300 = sshll.u32 %s7, 4
          %s301 = int_to_ptr.hbm [resolvable:$true] %s300
          %s302 = sshll.u32 [#allocation7], 4
          %s303 = int_to_ptr.vmem [resolvable:$true] %s302
          %308 = dma.hbm_to_vmem [thread:$0]  %s301, 1664, %s303, [#allocation6], 128, 128, 8
        $region40: #{tpu_custom_call.1} parent=11 // pred_fallthru
          _
        // Predicated region
        $region41: #{tpu_custom_call.1} parent=11 // pred_check
          %p309 = pneg %p214
        $region42: #{tpu_custom_call.1} parent=11 // pred_check_branch
          %311 = sbr.rel (%p309) target = $region44
        $region43: #{tpu_custom_call.1} parent=11 // pred_region
          _
        $region44: #{tpu_custom_call.1} parent=11 // pred_fallthru
          _
      $region12: #{tpu_custom_call.1} parent=5 // pred_fallthru
        _
      %p312 = scmp.lt.s32.totalorder %s20, 2
      // Predicated region
      $region45: #{tpu_custom_call.1} parent=5 // pred_check
        %p313 = pneg %p312
      $region46: #{tpu_custom_call.1} parent=5 // pred_check_branch
        %315 = sbr.rel (%p313) target = $region48
      $region47: #{tpu_custom_call.1} parent=5 // pred_region
        // Predicated region
        $region49: #{tpu_custom_call.1} parent=47 // pred_check
          %p316 = pneg %p40
        $region50: #{tpu_custom_call.1} parent=47 // pred_check_branch
          %318 = sbr.rel (%p316) target = $region52
        $region51: #{tpu_custom_call.1} parent=47 // pred_region
          %s319 = smul.u32 4, %s20
          %p320 = scmp.lt.s32.totalorder %s319, 7
          %s321 = scalar_select %p320, %s319, 7
          %s322 = smul.addr %s321, 8
          %s323 = scalar_lea.vmem %s0, %s322
          %s324 = smul.u32 4, %s20
        $region52: #{tpu_custom_call.1} parent=47 // pred_fallthru
          _
      $region48: #{tpu_custom_call.1} parent=5 // pred_fallthru
        _
      %p325 = scmp.le.s32.totalorder 1, %s20
      %p326 = scmp.lt.s32.totalorder %s20, 3
      %p327 = pnand %p325, %p326
      %p328 = pneg %p327
      // Predicated region
      $region53: #{tpu_custom_call.1} parent=5 // pred_check
        _
      $region54: #{tpu_custom_call.1} parent=5 // pred_check_branch
        %330 = sbr.rel (%p327) target = $region56
      $region55: #{tpu_custom_call.1} parent=5 // pred_region
        %s331 = ssub.s32 %s20, 1
        // Predicated region
        $region57: #{tpu_custom_call.1} parent=55 // pred_check
          %p332 = pneg %p109
        $region58: #{tpu_custom_call.1} parent=55 // pred_check_branch
          %334 = sbr.rel (%p332) target = $region60
        $region59: #{tpu_custom_call.1} parent=55 // pred_region
          %336 = dma.done [#allocation3], 2048
        $region60: #{tpu_custom_call.1} parent=55 // pred_fallthru
          _
        // Predicated region
        $region61: #{tpu_custom_call.1} parent=55 // pred_check
          %p337 = pneg %p151
        $region62: #{tpu_custom_call.1} parent=55 // pred_check_branch
          %339 = sbr.rel (%p337) target = $region64
        $region63: #{tpu_custom_call.1} parent=55 // pred_region
          %341 = dma.done [#allocation6], 2432
        $region64: #{tpu_custom_call.1} parent=55 // pred_fallthru
          _
        // Predicated region
        $region65: #{tpu_custom_call.1} parent=55 // pred_check
          %p342 = pneg %p193
        $region66: #{tpu_custom_call.1} parent=55 // pred_check_branch
          %344 = sbr.rel (%p342) target = $region68
        $region67: #{tpu_custom_call.1} parent=55 // pred_region
          %346 = dma.done [#allocation6], 1664
        $region68: #{tpu_custom_call.1} parent=55 // pred_fallthru
          _
        %s347 = smul.u32 4, %s25
        %p348 = scmp.lt.s32.totalorder %s347, 7
        %s349 = scalar_select %p348, %s347, 7
        %s350 = smul.addr %s349, 8
        %s351 = scalar_lea.vmem %s0, %s350
        %p352 = pneg %p46
        %p353 = pneg %p43
        %p354 = pneg %p67
        %p355 = pneg %p64
        %p356 = pneg %p88
        %p357 = pneg %p85
        %p358 = pneg %p109
        %p359 = pneg %p106
        %p360 = pneg %p130
        %p361 = pneg %p127
        %p362 = pneg %p151
        %p363 = pneg %p148
        %p364 = pneg %p172
        %p365 = pneg %p169
        %p366 = pneg %p193
        %p367 = pneg %p190
        %p368 = pneg %p214
        %p369 = pneg %p211
        %p370 = pneg %p240
        %p371 = pneg %p237
        %s372 = sand.u32 %s227, 1
        %s373 = scalar_lea.sflag [#allocation4], %s372
        %s374 = sand.u32 %s227, 1
        %s375 = smul.addr %s374, 32
        %s376 = scalar_lea.vmem [#allocation8], %s375
        %s377 = smul.u32 4, %s25
        %p378 = scmp.lt.s32.totalorder %s377, 7
        %s379 = scalar_select %p378, %s377, 7
        %s380 = smul.addr %s379, 8
        %s381 = scalar_lea.vmem %s0, %s380
        %s382 = smul.u32 4, %s25
        %s383 = smul.u32 4, %s25
        %v384 = vld [vmem:[%s381] sm:$0xff]
        %v385 = vld [vmem:[%s381 + $0x8] sm:$0xff]
        %v386 = vld [vmem:[%s381 + $0x10] sm:$0xff]
        %v387 = vld [vmem:[%s381 + $0x18] sm:$0xff]
        %v388 = vld [vmem:[%s1] sm:$0xff]
        %v389 = vld [vmem:[%s1 + $0x8] sm:$0xff]
        %v390 = vld [vmem:[%s1 + $0x10] sm:$0xff]
        %v391 = vld [vmem:[%s1 + $0x18] sm:$0xff]
        %v392 = vld [vmem:[%s2] sm:$0x1]
        %v394 = vperm.slane %v392, 0
        %vm396 = vcmask 261120
        %v398 = vsel %vm396, %v384, 0
        %v401 = vsel %vm396, %v385, 0
        %v404 = vsel %vm396, %v386, 0
        %v407 = vsel %vm396, %v387, 0
        %409 = vmatpush.msra.mxu0 0.0
        %410 = vmatpush.msra.mxu0 0.0
        %411 = vmatpush.msra.mxu0 0.0
        %412 = vmatpush.msra.mxu0 0.0
        %413 = vmatpush.msra.mxu0 0.0
        %414 = vmatpush.msra.mxu0 0.0
        %415 = vmatpush.msra.mxu0 0.0
        %416 = vmatpush.msra.mxu0 0.0
        %417 = vmatpush.msra.mxu0 0.0
        %418 = vmatpush.msra.mxu0 0.0
        %419 = vmatpush.msra.mxu0 0.0
        %420 = vmatpush.msra.mxu0 0.0
        %421 = vmatpush.msra.mxu0 %v391
        %422 = vmatpush.msra.mxu0 %v390
        %423 = vmatpush.msra.mxu0 %v389
        %424 = vmatpush.msra.mxu0 %v388
        %425 = vmatmul.f32.gmra.mxu0 %v398
        %v426 = vpop.f32.mrf.mxu0
        %v427 = vadd.f32 %v394, %v426
        %428 = vmatmul.f32.gmra.mxu0 %v401
        %v429 = vpop.f32.mrf.mxu0
        %v430 = vadd.f32 %v394, %v429
        %431 = vmatmul.f32.gmra.mxu0 %v404
        %v432 = vpop.f32.mrf.mxu0
        %v433 = vadd.f32 %v394, %v432
        %434 = vmatmul.f32.gmra.mxu0 %v407
        %v435 = vpop.f32.mrf.mxu0
        %v436 = vadd.f32 %v394, %v435
        %437 = vdwg.mxu0
        %vm438 = vcmp.gt.f32.partialorder %v427, 0.0
        %vm439 = vcmp.gt.f32.partialorder %v430, 0.0
        %vm440 = vcmp.gt.f32.partialorder %v433, 0.0
        %vm441 = vcmp.gt.f32.partialorder %v436, 0.0
        %v442 = vmul.f32 %v427, 0.01
        %v443 = vmul.f32 %v430, 0.01
        %v444 = vmul.f32 %v433, 0.01
        %v445 = vmul.f32 %v436, 0.01
        %v446 = vsel %vm438, %v427, %v442
        %v447 = vsel %vm439, %v430, %v443
        %v448 = vsel %vm440, %v433, %v444
        %v449 = vsel %vm441, %v436, %v445
        %v450 = vld [vmem:[#allocation2] sm:$0xff]
        %v451 = vld [vmem:[#allocation2 + $0x8] sm:$0xff]
        %v452 = vld [vmem:[#allocation2 + $0x10] sm:$0xff]
        %v453 = vld [vmem:[#allocation2 + $0x18] sm:$0xff]
        %v454 = vld [vmem:[#allocation2 + $0x20] sm:$0xff]
        %v455 = vld [vmem:[#allocation2 + $0x28] sm:$0xff]
        %v456 = vld [vmem:[#allocation2 + $0x30] sm:$0xff]
        %v457 = vld [vmem:[#allocation2 + $0x38] sm:$0xff]
        %v458 = vld [vmem:[#allocation2 + $0x40] sm:$0xff]
        %v459 = vld [vmem:[#allocation2 + $0x48] sm:$0xff]
        %v460 = vld [vmem:[#allocation2 + $0x50] sm:$0xff]
        %v461 = vld [vmem:[#allocation2 + $0x58] sm:$0xff]
        %v462 = vld [vmem:[#allocation2 + $0x60] sm:$0xff]
        %v463 = vld [vmem:[#allocation2 + $0x68] sm:$0xff]
        %v464 = vld [vmem:[#allocation2 + $0x70] sm:$0xff]
        %v465 = vld [vmem:[#allocation2 + $0x78] sm:$0xff]
        %v466 = vld [vmem:[%s4] sm:$0x3]
        %v468 = vperm.slane %v466, 0
        %v469 = vperm.slane %v466, 1
        %vm472 = vcmask 523264
        %v474 = vsel %vm472, %v446, 0
        %v477 = vsel %vm472, %v447, 0
        %v480 = vsel %vm472, %v448, 0
        %v483 = vsel %vm472, %v449, 0
        %485 = vmatpush.msra.mxu0 0.0
        %486 = vmatpush.msra.mxu0 0.0
        %487 = vmatpush.msra.mxu0 0.0
        %488 = vmatpush.msra.mxu0 0.0
        %489 = vmatpush.msra.mxu0 0.0
        %490 = vmatpush.msra.mxu0 0.0
        %491 = vmatpush.msra.mxu0 0.0
        %492 = vmatpush.msra.mxu0 0.0
        %493 = vmatpush.msra.mxu0 %v464
        %494 = vmatpush.msra.mxu0 %v462
        %495 = vmatpush.msra.mxu0 %v460
        %496 = vmatpush.msra.mxu0 %v458
        %497 = vmatpush.msra.mxu0 %v456
        %498 = vmatpush.msra.mxu0 %v454
        %499 = vmatpush.msra.mxu0 %v452
        %500 = vmatpush.msra.mxu0 %v450
        %501 = vmatmul.f32.gmra.mxu0 %v474
        %v502 = vpop.f32.mrf.mxu0
        %v503 = vadd.f32 %v468, %v502
        %504 = vmatmul.f32.gmra.mxu0 %v477
        %v505 = vpop.f32.mrf.mxu0
        %v506 = vadd.f32 %v468, %v505
        %507 = vmatmul.f32.gmra.mxu0 %v480
        %v508 = vpop.f32.mrf.mxu0
        %v509 = vadd.f32 %v468, %v508
        %510 = vmatmul.f32.gmra.mxu0 %v483
        %v511 = vpop.f32.mrf.mxu0
        %v512 = vadd.f32 %v468, %v511
        %513 = vdwg.mxu0
        %514 = vmatpush.msra.mxu0 0.0
        %515 = vmatpush.msra.mxu0 0.0
        %516 = vmatpush.msra.mxu0 0.0
        %517 = vmatpush.msra.mxu0 0.0
        %518 = vmatpush.msra.mxu0 0.0
        %519 = vmatpush.msra.mxu0 0.0
        %520 = vmatpush.msra.mxu0 0.0
        %521 = vmatpush.msra.mxu0 0.0
        %522 = vmatpush.msra.mxu0 %v465
        %523 = vmatpush.msra.mxu0 %v463
        %524 = vmatpush.msra.mxu0 %v461
        %525 = vmatpush.msra.mxu0 %v459
        %526 = vmatpush.msra.mxu0 %v457
        %527 = vmatpush.msra.mxu0 %v455
        %528 = vmatpush.msra.mxu0 %v453
        %529 = vmatpush.msra.mxu0 %v451
        %530 = vmatmul.f32.gmra.mxu0 %v474
        %v531 = vpop.f32.mrf.mxu0
        %v532 = vadd.f32 %v469, %v531
        %533 = vmatmul.f32.gmra.mxu0 %v477
        %v534 = vpop.f32.mrf.mxu0
        %v535 = vadd.f32 %v469, %v534
        %536 = vmatmul.f32.gmra.mxu0 %v480
        %v537 = vpop.f32.mrf.mxu0
        %v538 = vadd.f32 %v469, %v537
        %539 = vmatmul.f32.gmra.mxu0 %v483
        %v540 = vpop.f32.mrf.mxu0
        %v541 = vadd.f32 %v469, %v540
        %542 = vdwg.mxu0
        %vm543 = vcmp.gt.f32.partialorder %v503, 0.0
        %vm544 = vcmp.gt.f32.partialorder %v532, 0.0
        %vm545 = vcmp.gt.f32.partialorder %v506, 0.0
        %vm546 = vcmp.gt.f32.partialorder %v535, 0.0
        %vm547 = vcmp.gt.f32.partialorder %v509, 0.0
        %vm548 = vcmp.gt.f32.partialorder %v538, 0.0
        %vm549 = vcmp.gt.f32.partialorder %v512, 0.0
        %vm550 = vcmp.gt.f32.partialorder %v541, 0.0
        %v551 = vmul.f32 %v503, 0.01
        %v552 = vmul.f32 %v532, 0.01
        %v553 = vmul.f32 %v506, 0.01
        %v554 = vmul.f32 %v535, 0.01
        %v555 = vmul.f32 %v509, 0.01
        %v556 = vmul.f32 %v538, 0.01
        %v557 = vmul.f32 %v512, 0.01
        %v558 = vmul.f32 %v541, 0.01
        %v559 = vsel %vm543, %v503, %v551
        %v560 = vsel %vm544, %v532, %v552
        %v561 = vsel %vm545, %v506, %v553
        %v562 = vsel %vm546, %v535, %v554
        %v563 = vsel %vm547, %v509, %v555
        %v564 = vsel %vm548, %v538, %v556
        %v565 = vsel %vm549, %v512, %v557
        %v566 = vsel %vm550, %v541, %v558
        %v567 = vld [vmem:[#allocation5] sm:$0xff]
        %v568 = vld [vmem:[#allocation5 + $0x8] sm:$0xff]
        %v569 = vld [vmem:[#allocation5 + $0x10] sm:$0xff]
        %v570 = vld [vmem:[#allocation5 + $0x18] sm:$0xff]
        %v571 = vld [vmem:[#allocation5 + $0x20] sm:$0xff]
        %v572 = vld [vmem:[#allocation5 + $0x28] sm:$0xff]
        %v573 = vld [vmem:[#allocation5 + $0x30] sm:$0xff]
        %v574 = vld [vmem:[#allocation5 + $0x38] sm:$0xff]
        %v575 = vld [vmem:[#allocation5 + $0x40] sm:$0xff]
        %v576 = vld [vmem:[#allocation5 + $0x48] sm:$0xff]
        %v577 = vld [vmem:[#allocation5 + $0x50] sm:$0xff]
        %v578 = vld [vmem:[#allocation5 + $0x58] sm:$0xff]
        %v579 = vld [vmem:[#allocation5 + $0x60] sm:$0xff]
        %v580 = vld [vmem:[#allocation5 + $0x68] sm:$0xff]
        %v581 = vld [vmem:[#allocation5 + $0x70] sm:$0xff]
        %v582 = vld [vmem:[#allocation5 + $0x78] sm:$0xff]
        %v583 = vld [vmem:[#allocation5 + $0x80] sm:$0xff]
        %v584 = vld [vmem:[#allocation5 + $0x88] sm:$0xff]
        %v585 = vld [vmem:[#allocation5 + $0x90] sm:$0x3f]
        %v586 = vld [vmem:[%s6] sm:$0x1]
        %v588 = vperm.slane %v586, 0
        %vm590 = vcmask 179200
        %v592 = vsel %vm590, %v560, 0
        %v595 = vsel %vm590, %v562, 0
        %v598 = vsel %vm590, %v564, 0
        %v601 = vsel %vm590, %v566, 0
        %vm603 = vcmask 1045504
        %v605 = vsel %vm603, %v585, 0
        %607 = vmatpush.msra.mxu0 %v582
        %608 = vmatpush.msra.mxu0 %v581
        %609 = vmatpush.msra.mxu0 %v580
        %610 = vmatpush.msra.mxu0 %v579
        %611 = vmatpush.msra.mxu0 %v578
        %612 = vmatpush.msra.mxu0 %v577
        %613 = vmatpush.msra.mxu0 %v576
        %614 = vmatpush.msra.mxu0 %v575
        %615 = vmatpush.msra.mxu0 %v574
        %616 = vmatpush.msra.mxu0 %v573
        %617 = vmatpush.msra.mxu0 %v572
        %618 = vmatpush.msra.mxu0 %v571
        %619 = vmatpush.msra.mxu0 %v570
        %620 = vmatpush.msra.mxu0 %v569
        %621 = vmatpush.msra.mxu0 %v568
        %622 = vmatpush.msra.mxu0 %v567
        %623 = vmatmul.f32.gmra.mxu0 %v559
        %v624 = vpop.f32.mrf.mxu0
        %v625 = vadd.f32 %v588, %v624
        %626 = vmatmul.f32.gmra.mxu0 %v561
        %v627 = vpop.f32.mrf.mxu0
        %v628 = vadd.f32 %v588, %v627
        %629 = vmatmul.f32.gmra.mxu0 %v563
        %v630 = vpop.f32.mrf.mxu0
        %v631 = vadd.f32 %v588, %v630
        %632 = vmatmul.f32.gmra.mxu0 %v565
        %v633 = vpop.f32.mrf.mxu0
        %v634 = vadd.f32 %v588, %v633
        %635 = vdwg.mxu0
        %636 = vmatpush.msra.mxu0 0.0
        %637 = vmatpush.msra.mxu0 0.0
        %638 = vmatpush.msra.mxu0 0.0
        %639 = vmatpush.msra.mxu0 0.0
        %640 = vmatpush.msra.mxu0 0.0
        %641 = vmatpush.msra.mxu0 0.0
        %642 = vmatpush.msra.mxu0 0.0
        %643 = vmatpush.msra.mxu0 0.0
        %644 = vmatpush.msra.mxu0 0.0
        %645 = vmatpush.msra.mxu0 0.0
        %646 = vmatpush.msra.mxu0 0.0
        %647 = vmatpush.msra.mxu0 0.0
        %648 = vmatpush.msra.mxu0 0.0
        %649 = vmatpush.msra.mxu0 %v605
        %650 = vmatpush.msra.mxu0 %v584
        %651 = vmatpush.msra.mxu0 %v583
        %652 = vmatmul.f32.gmra.mxu0 %v592
        %v653 = vpop.f32.mrf.mxu0
        %v654 = vadd.f32 %v625, %v653
        %655 = vmatmul.f32.gmra.mxu0 %v595
        %v656 = vpop.f32.mrf.mxu0
        %v657 = vadd.f32 %v628, %v656
        %658 = vmatmul.f32.gmra.mxu0 %v598
        %v659 = vpop.f32.mrf.mxu0
        %v660 = vadd.f32 %v631, %v659
        %661 = vmatmul.f32.gmra.mxu0 %v601
        %v662 = vpop.f32.mrf.mxu0
        %v663 = vadd.f32 %v634, %v662
        %664 = vdwg.mxu0
        %vm665 = vcmp.gt.f32.partialorder %v654, 0.0
        %vm666 = vcmp.gt.f32.partialorder %v657, 0.0
        %vm667 = vcmp.gt.f32.partialorder %v660, 0.0
        %vm668 = vcmp.gt.f32.partialorder %v663, 0.0
        %v669 = vmul.f32 %v654, 0.01
        %v670 = vmul.f32 %v657, 0.01
        %v671 = vmul.f32 %v660, 0.01
        %v672 = vmul.f32 %v663, 0.01
        %v673 = vsel %vm665, %v654, %v669
        %v674 = vsel %vm666, %v657, %v670
        %v675 = vsel %vm667, %v660, %v671
        %v676 = vsel %vm668, %v663, %v672
        %v677 = vld [vmem:[#allocation7] sm:$0xff]
        %v678 = vld [vmem:[#allocation7 + $0x8] sm:$0xff]
        %v679 = vld [vmem:[#allocation7 + $0x10] sm:$0xff]
        %v680 = vld [vmem:[#allocation7 + $0x18] sm:$0xff]
        %v681 = vld [vmem:[#allocation7 + $0x20] sm:$0xff]
        %v682 = vld [vmem:[#allocation7 + $0x28] sm:$0xff]
        %v683 = vld [vmem:[#allocation7 + $0x30] sm:$0xff]
        %v684 = vld [vmem:[#allocation7 + $0x38] sm:$0xff]
        %v685 = vld [vmem:[#allocation7 + $0x40] sm:$0xff]
        %v686 = vld [vmem:[#allocation7 + $0x48] sm:$0xff]
        %v687 = vld [vmem:[#allocation7 + $0x50] sm:$0xff]
        %v688 = vld [vmem:[#allocation7 + $0x58] sm:$0xff]
        %v689 = vld [vmem:[#allocation7 + $0x60] sm:$0xf]
        %v690 = vld [vmem:[%s8] sm:$0x1]
        %v692 = vperm.slane %v690, 0
        %vm694 = vcmask 818176
        %v696 = vsel %vm694, %v673, 0
        %v699 = vsel %vm694, %v674, 0
        %v702 = vsel %vm694, %v675, 0
        %v705 = vsel %vm694, %v676, 0
        %vm707 = vcmask 1043456
        %v709 = vsel %vm707, %v689, 0
        %711 = vmatpush.msra.mxu0 0.0
        %712 = vmatpush.msra.mxu0 0.0
        %713 = vmatpush.msra.mxu0 0.0
        %714 = vmatpush.msra.mxu0 %v709
        %715 = vmatpush.msra.mxu0 %v688
        %716 = vmatpush.msra.mxu0 %v687
        %717 = vmatpush.msra.mxu0 %v686
        %718 = vmatpush.msra.mxu0 %v685
        %719 = vmatpush.msra.mxu0 %v684
        %720 = vmatpush.msra.mxu0 %v683
        %721 = vmatpush.msra.mxu0 %v682
        %722 = vmatpush.msra.mxu0 %v681
        %723 = vmatpush.msra.mxu0 %v680
        %724 = vmatpush.msra.mxu0 %v679
        %725 = vmatpush.msra.mxu0 %v678
        %726 = vmatpush.msra.mxu0 %v677
        %727 = vmatmul.f32.gmra.mxu0 %v696
        %v728 = vpop.f32.mrf.mxu0
        %v729 = vadd.f32 %v692, %v728
        %730 = vmatmul.f32.gmra.mxu0 %v699
        %v731 = vpop.f32.mrf.mxu0
        %v732 = vadd.f32 %v692, %v731
        %733 = vmatmul.f32.gmra.mxu0 %v702
        %v734 = vpop.f32.mrf.mxu0
        %v735 = vadd.f32 %v692, %v734
        %736 = vmatmul.f32.gmra.mxu0 %v705
        %v737 = vpop.f32.mrf.mxu0
        %v738 = vadd.f32 %v692, %v737
        %739 = vdwg.mxu0
        %740 = vst [vmem:[%s376] sm:$0xff] %v729
        %741 = vst [vmem:[%s376 + $0x8] sm:$0xff] %v732
        %742 = vst [vmem:[%s376 + $0x10] sm:$0xff] %v735
        %743 = vst [vmem:[%s376 + $0x18] sm:$0xff] %v738
        %s744 = sand.u32 %s227, 1
        %s745 = scalar_lea.sflag [#allocation4], %s744
        %s746 = sand.u32 %s227, 1
        %s747 = smul.addr %s746, 32
        %s748 = scalar_lea.vmem [#allocation8], %s747
        // Predicated region
        $region69: #{tpu_custom_call.1} parent=55 // pred_check
          %p749 = pneg %p237
        $region70: #{tpu_custom_call.1} parent=55 // pred_check_branch
          %751 = sbr.rel (%p749) target = $region72
        $region71: #{tpu_custom_call.1} parent=55 // pred_region
          %s752 = smul.u32 4, %s25
          %754 = vsyncadd %s745, 0
          %s755 = smul.addr %s752, 8
          %s756 = scalar_lea.hbm %s9, %s755
          %s757 = sshll.u32 %s748, 4
          %s758 = int_to_ptr.vmem [resolvable:$true] %s757
          %s759 = sshll.u32 %s756, 4
          %s760 = int_to_ptr.hbm [resolvable:$true] %s759
          %765 = dma.vmem_to_hbm [thread:$0]  %s758, 512, %s760, %s745, 128, 128, 8
        $region72: #{tpu_custom_call.1} parent=55 // pred_fallthru
          _
      $region56: #{tpu_custom_call.1} parent=5 // pred_fallthru
        _
      %p766 = scmp.le.s32.totalorder 2, %s20
      // Predicated region
      $region73: #{tpu_custom_call.1} parent=5 // pred_check
        %p767 = pneg %p766
      $region74: #{tpu_custom_call.1} parent=5 // pred_check_branch
        %769 = sbr.rel (%p767) target = $region76
      $region75: #{tpu_custom_call.1} parent=5 // pred_region
        %s770 = ssub.s32 %s20, 2
        // Predicated region
        $region77: #{tpu_custom_call.1} parent=75 // pred_check
          %p771 = pneg %p243
        $region78: #{tpu_custom_call.1} parent=75 // pred_check_branch
          %773 = sbr.rel (%p771) target = $region80
        $region79: #{tpu_custom_call.1} parent=75 // pred_region
          %s774 = sand.u32 %s228, 1
          %s775 = scalar_lea.sflag [#allocation4], %s774
          %s776 = sand.u32 %s228, 1
          %s777 = smul.addr %s776, 32
          %s778 = scalar_lea.vmem [#allocation8], %s777
          %780 = dma.done %s775, 512
        $region80: #{tpu_custom_call.1} parent=75 // pred_fallthru
          _
      $region76: #{tpu_custom_call.1} parent=5 // pred_fallthru
        _
    $region6: #{tpu_custom_call.1} parent=1 // loop_footer
      %s24 = sadd.s32 1, %s20
    $region7: #{tpu_custom_call.1} parent=1 // loop_footer_branch
      %19 = sbr.rel target = $region3
    $region8: #{tpu_custom_call.1} parent=1 // loop_exit
      _
    %781 = vsyncpa [#allocation3], 1
    %s782 = scalar_lea.sflag [#allocation3], 1
    %783 = vsyncpa %s782, 1
    %784 = vsyncpa [#allocation6], 1
    %785 = vsyncpa [#allocation4], 1
    %s786 = scalar_lea.sflag [#allocation4], 1
    %787 = vsyncpa %s786, 1

</llo_original>
